<compile_context>
chip_gen: v7x
topology: tpu7x:2x2x1
jax: 0.10.0
libtpu: 0.0.40
codegen_flags: <defaults>
</compile_context>

<pallas_src>
import functools

import jax
import jax.numpy as jnp
from jax import lax
from jax.experimental import pallas as pl
from jax.experimental.pallas import tpu as pltpu


def _round_up(x, m):
    return (x + m - 1) // m * m


def prepare_params(w_i2h, b_i2h, w_i2o, b_i2o):
    """One-time layout prep: split each Linear into its hidden / input parts.

    PyTorch Linear: y = x @ W.T + b, W of shape (out, I+H) with combined
    ordered [input | hidden].  Recurrent (hidden) parts are transposed and
    zero-padded to lane tiles once; input parts stay unpadded in I (they are
    only used in the hoisted XLA projection) but zero-padded in the output
    lanes so projected activations come out already padded with exact zeros.
    """
    H, K = w_i2h.shape
    I = K - H
    O = w_i2o.shape[0]
    H_pad = _round_up(H, 128)
    O_pad = _round_up(O, 128)

    f32 = jnp.float32
    w_i2h = w_i2h.astype(f32)
    w_i2o = w_i2o.astype(f32)

    # Recurrent weights (hidden -> hidden / output). Zero-padded rows/cols keep
    # padded lanes exactly 0 every step.
    w_hh = jnp.zeros((H_pad, H_pad), f32).at[:H, :H].set(w_i2h[:, I:].T)
    w_ho = jnp.zeros((H_pad, O_pad), f32).at[:H, :O].set(w_i2o[:, I:].T)

    # Input-projection weights + biases (hoisted, parallel over T*B).
    w_xh = jnp.zeros((I, H_pad), f32).at[:, :H].set(w_i2h[:, :I].T)
    w_xo = jnp.zeros((I, O_pad), f32).at[:, :O].set(w_i2o[:, :I].T)
    b_h = jnp.zeros((H_pad,), f32).at[:H].set(b_i2h.astype(f32))
    b_o = jnp.zeros((O_pad,), f32).at[:O].set(b_i2o.astype(f32))

    dims = dict(I=I, H=H, O=O, H_pad=H_pad, O_pad=O_pad)
    return dict(w_hh=w_hh, w_ho=w_ho, w_xh=w_xh, w_xo=w_xo,
                b_h=b_h, b_o=b_o, dims=dims)


def _rnn_chunk_kernel(xph_ref, xpo_ref, h0_ref, whh_ref, who_ref,   # inputs
                      out_ref, hfin_ref,                            # outputs
                      *, TB, T):
    """One grid step == TB RNN timesteps.

    hfin_ref (constant index_map -> resident in VMEM for the whole grid)
    doubles as the cross-chunk hidden-state carry; it is only written back to
    HBM once, at the end of the grid.
    """
    c = pl.program_id(0)

    @pl.when(c == 0)
    def _():
        hfin_ref[...] = h0_ref[...]          # seed the resident hidden state

    whh = whh_ref[...]                       # resident recurrent weights
    who = who_ref[...]
    needs_guard = (T % TB) != 0              # static (trace-time) flag

    def step(i, h):
        # Hidden head first: the ONLY op on the serial critical path
        # ((B_pad, H_pad) @ (H_pad, H_pad), bias already folded into xproj).
        h_new = jnp.dot(h, whh, preferred_element_type=jnp.float32) + xph_ref[i]
        # Output head consumes the OLD hidden (module semantics) and does not
        # feed the recurrence -> off the critical path.
        out_ref[i] = jax.nn.sigmoid(
            jnp.dot(h, who, preferred_element_type=jnp.float32) + xpo_ref[i])
        if needs_guard:
            valid = (c * TB + i) < T         # don't advance h on padded steps
            h_new = jnp.where(valid, h_new, h)
        return h_new

    hfin_ref[...] = lax.fori_loop(0, TB, step, hfin_ref[...], unroll=True)


def rnn_sequence_forward(xs, h0, params, *, time_chunk=8):
    """Run the RNN cell over a whole sequence.

    xs: (T, B, input_size) float32
    h0: (B, hidden_size) float32
    returns (outputs, final_hidden) = ((T, B, O), (B, H))
    """
    dims = params["dims"]
    I, H, O = dims["I"], dims["H"], dims["O"]
    H_pad, O_pad = dims["H_pad"], dims["O_pad"]

    T, B, I_in = xs.shape
    assert I_in == I
    B_pad = _round_up(max(B, 8), 8)
    TB = min(time_chunk, T)
    T_pad = _round_up(T, TB)

    xs = xs.astype(jnp.float32)
    h0 = h0.astype(jnp.float32)

    # Small batch/time pad only (x keeps its raw 26 feature lanes).
    xs_p = jnp.zeros((T_pad, B_pad, I), jnp.float32).at[:T, :B].set(xs)

    # ---- Hoisted input projection: one big parallel matmul (M = T_pad*B_pad),
    # bias folded in.  Zero-padded W_x / b columns guarantee the padded output
    # lanes [H:H_pad) / [O:O_pad) are exactly 0.
    xproj_h = jnp.einsum('tbi,ih->tbh', xs_p, params["w_xh"]) + params["b_h"]
    xproj_o = jnp.einsum('tbi,io->tbo', xs_p, params["w_xo"]) + params["b_o"]

    h0_p = jnp.zeros((B_pad, H_pad), jnp.float32).at[:B, :H].set(h0)

    kernel = functools.partial(_rnn_chunk_kernel, TB=TB, T=T)

    grid_spec = pltpu.PrefetchScalarGridSpec(
        num_scalar_prefetch=0,
        grid=(T_pad // TB,),
        in_specs=[
            pl.BlockSpec((TB, B_pad, H_pad), lambda c: (c, 0, 0)),  # xproj_h chunk
            pl.BlockSpec((TB, B_pad, O_pad), lambda c: (c, 0, 0)),  # xproj_o chunk
            pl.BlockSpec((B_pad, H_pad), lambda c: (0, 0)),         # h0, resident
            pl.BlockSpec((H_pad, H_pad), lambda c: (0, 0)),         # W_hh, resident
            pl.BlockSpec((H_pad, O_pad), lambda c: (0, 0)),         # W_ho, resident
        ],
        out_specs=[
            pl.BlockSpec((TB, B_pad, O_pad), lambda c: (c, 0, 0)),  # outputs chunk
            pl.BlockSpec((B_pad, H_pad), lambda c: (0, 0)),         # final hidden / carry
        ],
    )

    out_pad, hfin_pad = pl.pallas_call(
        kernel,
        out_shape=(
            jax.ShapeDtypeStruct((T_pad, B_pad, O_pad), jnp.float32),
            jax.ShapeDtypeStruct((B_pad, H_pad), jnp.float32),
        ),
        grid_spec=grid_spec,
        compiler_params=pltpu.CompilerParams(
            dimension_semantics=("arbitrary",)),    # time axis carries state
    )(xproj_h, xproj_o, h0_p, params["w_hh"], params["w_ho"])

    return out_pad[:T, :B, :O], hfin_pad[:B, :H]


def rnn_forward(x, h, params):
    """Single-step forward with the exact semantics of the PyTorch module."""
    out, hid = rnn_sequence_forward(x[None], h, params, time_chunk=1)
    return out[0], hid


if __name__ == "__main__":
    # Shapes consistent with the module: input_size=26, hidden_size=256 (spec),
    # a small classification head, small batch, short sequence.
    input_size = 26
    hidden_size = 256
    output_size = 10
    batch = 2
    seq_len = 8

    key = jax.random.PRNGKey(0)
    kx, k1, k2, k3, k4 = jax.random.split(key, 5)

    fan_in = input_size + hidden_size
    bound = float(1.0 / (fan_in ** 0.5))
    w_i2h = jax.random.uniform(k1, (hidden_size, fan_in), jnp.float32, -bound, bound)
    b_i2h = jax.random.uniform(k2, (hidden_size,), jnp.float32, -bound, bound)
    w_i2o = jax.random.uniform(k3, (output_size, fan_in), jnp.float32, -bound, bound)
    b_i2o = jax.random.uniform(k4, (output_size,), jnp.float32, -bound, bound)

    xs = jax.random.normal(kx, (seq_len, batch, input_size), jnp.float32)
    h0 = jnp.zeros((batch, hidden_size), jnp.float32)   # init_hidden(), broadcast over batch

    # One-time parameter layout prep (hoisted off the hot path).
    params = prepare_params(w_i2h, b_i2h, w_i2o, b_i2o)

    outs, h_final = rnn_sequence_forward(xs, h0, params)
    jax.block_until_ready((outs, h_final))

    # Pure-JAX reference: the module's forward applied step by step.
    def ref_step(h, x):
        comb = jnp.concatenate([x, h], axis=1)
        h_new = comb @ w_i2h.T + b_i2h
        out = jax.nn.sigmoid(comb @ w_i2o.T + b_i2o)
        return h_new, out

    h_ref, out_ref_seq = jax.lax.scan(ref_step, h0, xs)

    # Tolerance accounts for TPU default matmul precision (bf16 MXU passes
    # with f32 accumulation) compounding slightly over the 8-step recurrence;
    # pass precision=jax.lax.Precision.HIGHEST everywhere for exact f32 parity.
    assert jnp.allclose(outs, out_ref_seq, atol=1e-3, rtol=1e-3), "sequence output mismatch"
    assert jnp.allclose(h_final, h_ref, atol=1e-3, rtol=1e-3), "final hidden mismatch"

    # Also validate the single-step API (exact module.forward semantics).
    out1, hid1 = rnn_forward(xs[0], h0, params)
    h1_ref, o1_ref = ref_step(h0, xs[0])
    assert jnp.allclose(out1, o1_ref, atol=1e-4, rtol=1e-4), "single-step output mismatch"
    assert jnp.allclose(hid1, h1_ref, atol=1e-4, rtol=1e-4), "single-step hidden mismatch"

    print("KERNEL_OK")
</pallas_src>

<mosaic_0001>
module attributes {stable_mosaic.version = 11 : i64} {
  func.func @_rnn_chunk_kernel(%arg0: i32, %arg1: memref<8x8x256xf32, #tpu.memory_space<vmem>>, %arg2: memref<8x8x128xf32, #tpu.memory_space<vmem>>, %arg3: memref<8x256xf32, #tpu.memory_space<vmem>>, %arg4: memref<256x256xf32, #tpu.memory_space<vmem>>, %arg5: memref<256x128xf32, #tpu.memory_space<vmem>>, %arg6: memref<8x8x128xf32, #tpu.memory_space<vmem>>, %arg7: memref<8x256xf32, #tpu.memory_space<vmem>>) attributes {dimension_semantics = [#tpu.dimension_semantics<arbitrary>], iteration_bounds = array<i64: 1>, scalar_prefetch = 0 : i64, scratch_operands = 0 : i64, tpu.core_type = #tpu.core_type<tc>, window_params = [{transform_indices = @transform_0, window_bounds = array<i64: 8, 8, 256>}, {transform_indices = @transform_1, window_bounds = array<i64: 8, 8, 128>}, {pipeline_mode = #tpu.pipeline_mode<synchronous>, transform_indices = @transform_2, window_bounds = array<i64: 8, 256>}, {pipeline_mode = #tpu.pipeline_mode<synchronous>, transform_indices = @transform_3, window_bounds = array<i64: 256, 256>}, {pipeline_mode = #tpu.pipeline_mode<synchronous>, transform_indices = @transform_4, window_bounds = array<i64: 256, 128>}, {transform_indices = @transform_5, window_bounds = array<i64: 8, 8, 128>}, {pipeline_mode = #tpu.pipeline_mode<synchronous>, transform_indices = @transform_6, window_bounds = array<i64: 8, 256>}]} {
    %c0_i32 = arith.constant 0 : i32
    %0 = arith.cmpi eq, %arg0, %c0_i32 : i32
    %1 = arith.extui %0 : i1 to i32
    %c0_i32_0 = arith.constant 0 : i32
    %2 = arith.cmpi ne, %1, %c0_i32_0 : i32
    scf.if %2 {
      %c0_80 = arith.constant 0 : index
      %c0_81 = arith.constant 0 : index
      %159 = vector.load %arg3[%c0_80, %c0_81] : memref<8x256xf32, #tpu.memory_space<vmem>>, vector<8x256xf32>
      %c0_82 = arith.constant 0 : index
      %c0_83 = arith.constant 0 : index
      %160 = vector.load %arg7[%c0_82, %c0_83] : memref<8x256xf32, #tpu.memory_space<vmem>>, vector<8x256xf32>
      tpu.vector_store %arg7[%c0_82, %c0_83], %159 {strides = array<i32>} : memref<8x256xf32, #tpu.memory_space<vmem>>, vector<8x256xf32>,
    } else {
    }
    %c0 = arith.constant 0 : index
    %c0_1 = arith.constant 0 : index
    %3 = vector.load %arg4[%c0, %c0_1] : memref<256x256xf32, #tpu.memory_space<vmem>>, vector<256x256xf32>
    %c0_2 = arith.constant 0 : index
    %c0_3 = arith.constant 0 : index
    %4 = vector.load %arg5[%c0_2, %c0_3] : memref<256x128xf32, #tpu.memory_space<vmem>>, vector<256x128xf32>
    %c0_4 = arith.constant 0 : index
    %c0_5 = arith.constant 0 : index
    %5 = vector.load %arg7[%c0_4, %c0_5] : memref<8x256xf32, #tpu.memory_space<vmem>>, vector<8x256xf32>
    %c0_i32_6 = arith.constant 0 : i32
    %cst = arith.constant dense<0.000000e+00> : vector<8x256xf32>
    %6 = tpu.matmul %5, %3, %cst {dimension_numbers = #tpu.dot_dimension_numbers<[1], [0], [0], [1], [0, 0, 1, 1], [], []>} : vector<8x256xf32>, vector<256x256xf32>, vector<8x256xf32> -> vector<8x256xf32>
    %7 = arith.index_cast %c0_i32_6 : i32 to index
    %c0_7 = arith.constant 0 : index
    %c0_8 = arith.constant 0 : index
    %8 = vector.load %arg1[%7, %c0_7, %c0_8] : memref<8x8x256xf32, #tpu.memory_space<vmem>>, vector<1x8x256xf32>
    %9 = vector.shape_cast %8 : vector<1x8x256xf32> to vector<8x256xf32>
    %10 = arith.addf %6, %9 : vector<8x256xf32>
    %cst_9 = arith.constant dense<0.000000e+00> : vector<8x128xf32>
    %11 = tpu.matmul %5, %4, %cst_9 {dimension_numbers = #tpu.dot_dimension_numbers<[1], [0], [0], [1], [0, 0, 1, 1], [], []>} : vector<8x256xf32>, vector<256x128xf32>, vector<8x128xf32> -> vector<8x128xf32>
    %12 = arith.index_cast %c0_i32_6 : i32 to index
    %c0_10 = arith.constant 0 : index
    %c0_11 = arith.constant 0 : index
    %13 = vector.load %arg2[%12, %c0_10, %c0_11] : memref<8x8x128xf32, #tpu.memory_space<vmem>>, vector<1x8x128xf32>
    %14 = vector.shape_cast %13 : vector<1x8x128xf32> to vector<8x128xf32>
    %15 = arith.addf %11, %14 : vector<8x128xf32>
    %16 = arith.negf %15 : vector<8x128xf32>
    %17 = math.exp %16 : vector<8x128xf32>
    %cst_12 = arith.constant 1.000000e+00 : f32
    %18 = vector.broadcast %cst_12 : f32 to vector<8x128xf32>
    %19 = arith.addf %18, %17 : vector<8x128xf32>
    %20 = arith.divf %18, %19 : vector<8x128xf32>
    %21 = arith.index_cast %c0_i32_6 : i32 to index
    %c0_13 = arith.constant 0 : index
    %c0_14 = arith.constant 0 : index
    %22 = vector.load %arg6[%21, %c0_13, %c0_14] : memref<8x8x128xf32, #tpu.memory_space<vmem>>, vector<1x8x128xf32>
    %23 = vector.shape_cast %22 : vector<1x8x128xf32> to vector<8x128xf32>
    %24 = vector.shape_cast %20 : vector<8x128xf32> to vector<1x8x128xf32>
    tpu.vector_store %arg6[%21, %c0_13, %c0_14], %24 {strides = array<i32>} : memref<8x8x128xf32, #tpu.memory_space<vmem>>, vector<1x8x128xf32>,
    %c1_i32 = arith.constant 1 : i32
    %cst_15 = arith.constant dense<0.000000e+00> : vector<8x256xf32>
    %25 = tpu.matmul %10, %3, %cst_15 {dimension_numbers = #tpu.dot_dimension_numbers<[1], [0], [0], [1], [0, 0, 1, 1], [], []>} : vector<8x256xf32>, vector<256x256xf32>, vector<8x256xf32> -> vector<8x256xf32>
    %26 = arith.index_cast %c1_i32 : i32 to index
    %c0_16 = arith.constant 0 : index
    %c0_17 = arith.constant 0 : index
    %27 = vector.load %arg1[%26, %c0_16, %c0_17] : memref<8x8x256xf32, #tpu.memory_space<vmem>>, vector<1x8x256xf32>
    %28 = vector.shape_cast %27 : vector<1x8x256xf32> to vector<8x256xf32>
    %29 = arith.addf %25, %28 : vector<8x256xf32>
    %cst_18 = arith.constant dense<0.000000e+00> : vector<8x128xf32>
    %30 = tpu.matmul %10, %4, %cst_18 {dimension_numbers = #tpu.dot_dimension_numbers<[1], [0], [0], [1], [0, 0, 1, 1], [], []>} : vector<8x256xf32>, vector<256x128xf32>, vector<8x128xf32> -> vector<8x128xf32>
    %31 = arith.index_cast %c1_i32 : i32 to index
    %c0_19 = arith.constant 0 : index
    %c0_20 = arith.constant 0 : index
    %32 = vector.load %arg2[%31, %c0_19, %c0_20] : memref<8x8x128xf32, #tpu.memory_space<vmem>>, vector<1x8x128xf32>
    %33 = vector.shape_cast %32 : vector<1x8x128xf32> to vector<8x128xf32>
    %34 = arith.addf %30, %33 : vector<8x128xf32>
    %35 = arith.negf %34 : vector<8x128xf32>
    %36 = math.exp %35 : vector<8x128xf32>
    %cst_21 = arith.constant 1.000000e+00 : f32
    %37 = vector.broadcast %cst_21 : f32 to vector<8x128xf32>
    %38 = arith.addf %37, %36 : vector<8x128xf32>
    %39 = arith.divf %37, %38 : vector<8x128xf32>
    %40 = arith.index_cast %c1_i32 : i32 to index
    %c0_22 = arith.constant 0 : index
    %c0_23 = arith.constant 0 : index
    %41 = vector.load %arg6[%40, %c0_22, %c0_23] : memref<8x8x128xf32, #tpu.memory_space<vmem>>, vector<1x8x128xf32>
    %42 = vector.shape_cast %41 : vector<1x8x128xf32> to vector<8x128xf32>
    %43 = vector.shape_cast %39 : vector<8x128xf32> to vector<1x8x128xf32>
    tpu.vector_store %arg6[%40, %c0_22, %c0_23], %43 {strides = array<i32>} : memref<8x8x128xf32, #tpu.memory_space<vmem>>, vector<1x8x128xf32>,
    %c2_i32 = arith.constant 2 : i32
    %cst_24 = arith.constant dense<0.000000e+00> : vector<8x256xf32>
    %44 = tpu.matmul %29, %3, %cst_24 {dimension_numbers = #tpu.dot_dimension_numbers<[1], [0], [0], [1], [0, 0, 1, 1], [], []>} : vector<8x256xf32>, vector<256x256xf32>, vector<8x256xf32> -> vector<8x256xf32>
    %45 = arith.index_cast %c2_i32 : i32 to index
    %c0_25 = arith.constant 0 : index
    %c0_26 = arith.constant 0 : index
    %46 = vector.load %arg1[%45, %c0_25, %c0_26] : memref<8x8x256xf32, #tpu.memory_space<vmem>>, vector<1x8x256xf32>
    %47 = vector.shape_cast %46 : vector<1x8x256xf32> to vector<8x256xf32>
    %48 = arith.addf %44, %47 : vector<8x256xf32>
    %cst_27 = arith.constant dense<0.000000e+00> : vector<8x128xf32>
    %49 = tpu.matmul %29, %4, %cst_27 {dimension_numbers = #tpu.dot_dimension_numbers<[1], [0], [0], [1], [0, 0, 1, 1], [], []>} : vector<8x256xf32>, vector<256x128xf32>, vector<8x128xf32> -> vector<8x128xf32>
    %50 = arith.index_cast %c2_i32 : i32 to index
    %c0_28 = arith.constant 0 : index
    %c0_29 = arith.constant 0 : index
    %51 = vector.load %arg2[%50, %c0_28, %c0_29] : memref<8x8x128xf32, #tpu.memory_space<vmem>>, vector<1x8x128xf32>
    %52 = vector.shape_cast %51 : vector<1x8x128xf32> to vector<8x128xf32>
    %53 = arith.addf %49, %52 : vector<8x128xf32>
    %54 = arith.negf %53 : vector<8x128xf32>
    %55 = math.exp %54 : vector<8x128xf32>
    %cst_30 = arith.constant 1.000000e+00 : f32
    %56 = vector.broadcast %cst_30 : f32 to vector<8x128xf32>
    %57 = arith.addf %56, %55 : vector<8x128xf32>
    %58 = arith.divf %56, %57 : vector<8x128xf32>
    %59 = arith.index_cast %c2_i32 : i32 to index
    %c0_31 = arith.constant 0 : index
    %c0_32 = arith.constant 0 : index
    %60 = vector.load %arg6[%59, %c0_31, %c0_32] : memref<8x8x128xf32, #tpu.memory_space<vmem>>, vector<1x8x128xf32>
    %61 = vector.shape_cast %60 : vector<1x8x128xf32> to vector<8x128xf32>
    %62 = vector.shape_cast %58 : vector<8x128xf32> to vector<1x8x128xf32>
    tpu.vector_store %arg6[%59, %c0_31, %c0_32], %62 {strides = array<i32>} : memref<8x8x128xf32, #tpu.memory_space<vmem>>, vector<1x8x128xf32>,
    %c3_i32 = arith.constant 3 : i32
    %cst_33 = arith.constant dense<0.000000e+00> : vector<8x256xf32>
    %63 = tpu.matmul %48, %3, %cst_33 {dimension_numbers = #tpu.dot_dimension_numbers<[1], [0], [0], [1], [0, 0, 1, 1], [], []>} : vector<8x256xf32>, vector<256x256xf32>, vector<8x256xf32> -> vector<8x256xf32>
    %64 = arith.index_cast %c3_i32 : i32 to index
    %c0_34 = arith.constant 0 : index
    %c0_35 = arith.constant 0 : index
    %65 = vector.load %arg1[%64, %c0_34, %c0_35] : memref<8x8x256xf32, #tpu.memory_space<vmem>>, vector<1x8x256xf32>
    %66 = vector.shape_cast %65 : vector<1x8x256xf32> to vector<8x256xf32>
    %67 = arith.addf %63, %66 : vector<8x256xf32>
    %cst_36 = arith.constant dense<0.000000e+00> : vector<8x128xf32>
    %68 = tpu.matmul %48, %4, %cst_36 {dimension_numbers = #tpu.dot_dimension_numbers<[1], [0], [0], [1], [0, 0, 1, 1], [], []>} : vector<8x256xf32>, vector<256x128xf32>, vector<8x128xf32> -> vector<8x128xf32>
    %69 = arith.index_cast %c3_i32 : i32 to index
    %c0_37 = arith.constant 0 : index
    %c0_38 = arith.constant 0 : index
    %70 = vector.load %arg2[%69, %c0_37, %c0_38] : memref<8x8x128xf32, #tpu.memory_space<vmem>>, vector<1x8x128xf32>
    %71 = vector.shape_cast %70 : vector<1x8x128xf32> to vector<8x128xf32>
    %72 = arith.addf %68, %71 : vector<8x128xf32>
    %73 = arith.negf %72 : vector<8x128xf32>
    %74 = math.exp %73 : vector<8x128xf32>
    %cst_39 = arith.constant 1.000000e+00 : f32
    %75 = vector.broadcast %cst_39 : f32 to vector<8x128xf32>
    %76 = arith.addf %75, %74 : vector<8x128xf32>
    %77 = arith.divf %75, %76 : vector<8x128xf32>
    %78 = arith.index_cast %c3_i32 : i32 to index
    %c0_40 = arith.constant 0 : index
    %c0_41 = arith.constant 0 : index
    %79 = vector.load %arg6[%78, %c0_40, %c0_41] : memref<8x8x128xf32, #tpu.memory_space<vmem>>, vector<1x8x128xf32>
    %80 = vector.shape_cast %79 : vector<1x8x128xf32> to vector<8x128xf32>
    %81 = vector.shape_cast %77 : vector<8x128xf32> to vector<1x8x128xf32>
    tpu.vector_store %arg6[%78, %c0_40, %c0_41], %81 {strides = array<i32>} : memref<8x8x128xf32, #tpu.memory_space<vmem>>, vector<1x8x128xf32>,
    %c4_i32 = arith.constant 4 : i32
    %cst_42 = arith.constant dense<0.000000e+00> : vector<8x256xf32>
    %82 = tpu.matmul %67, %3, %cst_42 {dimension_numbers = #tpu.dot_dimension_numbers<[1], [0], [0], [1], [0, 0, 1, 1], [], []>} : vector<8x256xf32>, vector<256x256xf32>, vector<8x256xf32> -> vector<8x256xf32>
    %83 = arith.index_cast %c4_i32 : i32 to index
    %c0_43 = arith.constant 0 : index
    %c0_44 = arith.constant 0 : index
    %84 = vector.load %arg1[%83, %c0_43, %c0_44] : memref<8x8x256xf32, #tpu.memory_space<vmem>>, vector<1x8x256xf32>
    %85 = vector.shape_cast %84 : vector<1x8x256xf32> to vector<8x256xf32>
    %86 = arith.addf %82, %85 : vector<8x256xf32>
    %cst_45 = arith.constant dense<0.000000e+00> : vector<8x128xf32>
    %87 = tpu.matmul %67, %4, %cst_45 {dimension_numbers = #tpu.dot_dimension_numbers<[1], [0], [0], [1], [0, 0, 1, 1], [], []>} : vector<8x256xf32>, vector<256x128xf32>, vector<8x128xf32> -> vector<8x128xf32>
    %88 = arith.index_cast %c4_i32 : i32 to index
    %c0_46 = arith.constant 0 : index
    %c0_47 = arith.constant 0 : index
    %89 = vector.load %arg2[%88, %c0_46, %c0_47] : memref<8x8x128xf32, #tpu.memory_space<vmem>>, vector<1x8x128xf32>
    %90 = vector.shape_cast %89 : vector<1x8x128xf32> to vector<8x128xf32>
    %91 = arith.addf %87, %90 : vector<8x128xf32>
    %92 = arith.negf %91 : vector<8x128xf32>
    %93 = math.exp %92 : vector<8x128xf32>
    %cst_48 = arith.constant 1.000000e+00 : f32
    %94 = vector.broadcast %cst_48 : f32 to vector<8x128xf32>
    %95 = arith.addf %94, %93 : vector<8x128xf32>
    %96 = arith.divf %94, %95 : vector<8x128xf32>
    %97 = arith.index_cast %c4_i32 : i32 to index
    %c0_49 = arith.constant 0 : index
    %c0_50 = arith.constant 0 : index
    %98 = vector.load %arg6[%97, %c0_49, %c0_50] : memref<8x8x128xf32, #tpu.memory_space<vmem>>, vector<1x8x128xf32>
    %99 = vector.shape_cast %98 : vector<1x8x128xf32> to vector<8x128xf32>
    %100 = vector.shape_cast %96 : vector<8x128xf32> to vector<1x8x128xf32>
    tpu.vector_store %arg6[%97, %c0_49, %c0_50], %100 {strides = array<i32>} : memref<8x8x128xf32, #tpu.memory_space<vmem>>, vector<1x8x128xf32>,
    %c5_i32 = arith.constant 5 : i32
    %cst_51 = arith.constant dense<0.000000e+00> : vector<8x256xf32>
    %101 = tpu.matmul %86, %3, %cst_51 {dimension_numbers = #tpu.dot_dimension_numbers<[1], [0], [0], [1], [0, 0, 1, 1], [], []>} : vector<8x256xf32>, vector<256x256xf32>, vector<8x256xf32> -> vector<8x256xf32>
    %102 = arith.index_cast %c5_i32 : i32 to index
    %c0_52 = arith.constant 0 : index
    %c0_53 = arith.constant 0 : index
    %103 = vector.load %arg1[%102, %c0_52, %c0_53] : memref<8x8x256xf32, #tpu.memory_space<vmem>>, vector<1x8x256xf32>
    %104 = vector.shape_cast %103 : vector<1x8x256xf32> to vector<8x256xf32>
    %105 = arith.addf %101, %104 : vector<8x256xf32>
    %cst_54 = arith.constant dense<0.000000e+00> : vector<8x128xf32>
    %106 = tpu.matmul %86, %4, %cst_54 {dimension_numbers = #tpu.dot_dimension_numbers<[1], [0], [0], [1], [0, 0, 1, 1], [], []>} : vector<8x256xf32>, vector<256x128xf32>, vector<8x128xf32> -> vector<8x128xf32>
    %107 = arith.index_cast %c5_i32 : i32 to index
    %c0_55 = arith.constant 0 : index
    %c0_56 = arith.constant 0 : index
    %108 = vector.load %arg2[%107, %c0_55, %c0_56] : memref<8x8x128xf32, #tpu.memory_space<vmem>>, vector<1x8x128xf32>
    %109 = vector.shape_cast %108 : vector<1x8x128xf32> to vector<8x128xf32>
    %110 = arith.addf %106, %109 : vector<8x128xf32>
    %111 = arith.negf %110 : vector<8x128xf32>
    %112 = math.exp %111 : vector<8x128xf32>
    %cst_57 = arith.constant 1.000000e+00 : f32
    %113 = vector.broadcast %cst_57 : f32 to vector<8x128xf32>
    %114 = arith.addf %113, %112 : vector<8x128xf32>
    %115 = arith.divf %113, %114 : vector<8x128xf32>
    %116 = arith.index_cast %c5_i32 : i32 to index
    %c0_58 = arith.constant 0 : index
    %c0_59 = arith.constant 0 : index
    %117 = vector.load %arg6[%116, %c0_58, %c0_59] : memref<8x8x128xf32, #tpu.memory_space<vmem>>, vector<1x8x128xf32>
    %118 = vector.shape_cast %117 : vector<1x8x128xf32> to vector<8x128xf32>
    %119 = vector.shape_cast %115 : vector<8x128xf32> to vector<1x8x128xf32>
    tpu.vector_store %arg6[%116, %c0_58, %c0_59], %119 {strides = array<i32>} : memref<8x8x128xf32, #tpu.memory_space<vmem>>, vector<1x8x128xf32>,
    %c6_i32 = arith.constant 6 : i32
    %cst_60 = arith.constant dense<0.000000e+00> : vector<8x256xf32>
    %120 = tpu.matmul %105, %3, %cst_60 {dimension_numbers = #tpu.dot_dimension_numbers<[1], [0], [0], [1], [0, 0, 1, 1], [], []>} : vector<8x256xf32>, vector<256x256xf32>, vector<8x256xf32> -> vector<8x256xf32>
    %121 = arith.index_cast %c6_i32 : i32 to index
    %c0_61 = arith.constant 0 : index
    %c0_62 = arith.constant 0 : index
    %122 = vector.load %arg1[%121, %c0_61, %c0_62] : memref<8x8x256xf32, #tpu.memory_space<vmem>>, vector<1x8x256xf32>
    %123 = vector.shape_cast %122 : vector<1x8x256xf32> to vector<8x256xf32>
    %124 = arith.addf %120, %123 : vector<8x256xf32>
    %cst_63 = arith.constant dense<0.000000e+00> : vector<8x128xf32>
    %125 = tpu.matmul %105, %4, %cst_63 {dimension_numbers = #tpu.dot_dimension_numbers<[1], [0], [0], [1], [0, 0, 1, 1], [], []>} : vector<8x256xf32>, vector<256x128xf32>, vector<8x128xf32> -> vector<8x128xf32>
    %126 = arith.index_cast %c6_i32 : i32 to index
    %c0_64 = arith.constant 0 : index
    %c0_65 = arith.constant 0 : index
    %127 = vector.load %arg2[%126, %c0_64, %c0_65] : memref<8x8x128xf32, #tpu.memory_space<vmem>>, vector<1x8x128xf32>
    %128 = vector.shape_cast %127 : vector<1x8x128xf32> to vector<8x128xf32>
    %129 = arith.addf %125, %128 : vector<8x128xf32>
    %130 = arith.negf %129 : vector<8x128xf32>
    %131 = math.exp %130 : vector<8x128xf32>
    %cst_66 = arith.constant 1.000000e+00 : f32
    %132 = vector.broadcast %cst_66 : f32 to vector<8x128xf32>
    %133 = arith.addf %132, %131 : vector<8x128xf32>
    %134 = arith.divf %132, %133 : vector<8x128xf32>
    %135 = arith.index_cast %c6_i32 : i32 to index
    %c0_67 = arith.constant 0 : index
    %c0_68 = arith.constant 0 : index
    %136 = vector.load %arg6[%135, %c0_67, %c0_68] : memref<8x8x128xf32, #tpu.memory_space<vmem>>, vector<1x8x128xf32>
    %137 = vector.shape_cast %136 : vector<1x8x128xf32> to vector<8x128xf32>
    %138 = vector.shape_cast %134 : vector<8x128xf32> to vector<1x8x128xf32>
    tpu.vector_store %arg6[%135, %c0_67, %c0_68], %138 {strides = array<i32>} : memref<8x8x128xf32, #tpu.memory_space<vmem>>, vector<1x8x128xf32>,
    %c7_i32 = arith.constant 7 : i32
    %cst_69 = arith.constant dense<0.000000e+00> : vector<8x256xf32>
    %139 = tpu.matmul %124, %3, %cst_69 {dimension_numbers = #tpu.dot_dimension_numbers<[1], [0], [0], [1], [0, 0, 1, 1], [], []>} : vector<8x256xf32>, vector<256x256xf32>, vector<8x256xf32> -> vector<8x256xf32>
    %140 = arith.index_cast %c7_i32 : i32 to index
    %c0_70 = arith.constant 0 : index
    %c0_71 = arith.constant 0 : index
    %141 = vector.load %arg1[%140, %c0_70, %c0_71] : memref<8x8x256xf32, #tpu.memory_space<vmem>>, vector<1x8x256xf32>
    %142 = vector.shape_cast %141 : vector<1x8x256xf32> to vector<8x256xf32>
    %143 = arith.addf %139, %142 : vector<8x256xf32>
    %cst_72 = arith.constant dense<0.000000e+00> : vector<8x128xf32>
    %144 = tpu.matmul %124, %4, %cst_72 {dimension_numbers = #tpu.dot_dimension_numbers<[1], [0], [0], [1], [0, 0, 1, 1], [], []>} : vector<8x256xf32>, vector<256x128xf32>, vector<8x128xf32> -> vector<8x128xf32>
    %145 = arith.index_cast %c7_i32 : i32 to index
    %c0_73 = arith.constant 0 : index
    %c0_74 = arith.constant 0 : index
    %146 = vector.load %arg2[%145, %c0_73, %c0_74] : memref<8x8x128xf32, #tpu.memory_space<vmem>>, vector<1x8x128xf32>
    %147 = vector.shape_cast %146 : vector<1x8x128xf32> to vector<8x128xf32>
    %148 = arith.addf %144, %147 : vector<8x128xf32>
    %149 = arith.negf %148 : vector<8x128xf32>
    %150 = math.exp %149 : vector<8x128xf32>
    %cst_75 = arith.constant 1.000000e+00 : f32
    %151 = vector.broadcast %cst_75 : f32 to vector<8x128xf32>
    %152 = arith.addf %151, %150 : vector<8x128xf32>
    %153 = arith.divf %151, %152 : vector<8x128xf32>
    %154 = arith.index_cast %c7_i32 : i32 to index
    %c0_76 = arith.constant 0 : index
    %c0_77 = arith.constant 0 : index
    %155 = vector.load %arg6[%154, %c0_76, %c0_77] : memref<8x8x128xf32, #tpu.memory_space<vmem>>, vector<1x8x128xf32>
    %156 = vector.shape_cast %155 : vector<1x8x128xf32> to vector<8x128xf32>
    %157 = vector.shape_cast %153 : vector<8x128xf32> to vector<1x8x128xf32>
    tpu.vector_store %arg6[%154, %c0_76, %c0_77], %157 {strides = array<i32>} : memref<8x8x128xf32, #tpu.memory_space<vmem>>, vector<1x8x128xf32>,
    %c8_i32 = arith.constant 8 : i32
    %c0_78 = arith.constant 0 : index
    %c0_79 = arith.constant 0 : index
    %158 = vector.load %arg7[%c0_78, %c0_79] : memref<8x256xf32, #tpu.memory_space<vmem>>, vector<8x256xf32>
    tpu.vector_store %arg7[%c0_78, %c0_79], %143 {strides = array<i32>} : memref<8x256xf32, #tpu.memory_space<vmem>>, vector<8x256xf32>,
    return
  }
  func.func @transform_0(%arg0: i32) -> (i32, i32, i32) {
    %c0_i32 = arith.constant 0 : i32
    %c0_i32_0 = arith.constant 0 : i32
    %c0_i32_1 = arith.constant 0 : i32
    return %arg0, %c0_i32, %c0_i32_0 : i32, i32, i32
  }
  func.func @transform_1(%arg0: i32) -> (i32, i32, i32) {
    %c0_i32 = arith.constant 0 : i32
    %c0_i32_0 = arith.constant 0 : i32
    %c0_i32_1 = arith.constant 0 : i32
    return %arg0, %c0_i32, %c0_i32_0 : i32, i32, i32
  }
  func.func @transform_2(%arg0: i32) -> (i32, i32) {
    %c0_i32 = arith.constant 0 : i32
    %c0_i32_0 = arith.constant 0 : i32
    %c0_i32_1 = arith.constant 0 : i32
    return %c0_i32, %c0_i32_0 : i32, i32
  }
  func.func @transform_3(%arg0: i32) -> (i32, i32) {
    %c0_i32 = arith.constant 0 : i32
    %c0_i32_0 = arith.constant 0 : i32
    %c0_i32_1 = arith.constant 0 : i32
    return %c0_i32, %c0_i32_0 : i32, i32
  }
  func.func @transform_4(%arg0: i32) -> (i32, i32) {
    %c0_i32 = arith.constant 0 : i32
    %c0_i32_0 = arith.constant 0 : i32
    %c0_i32_1 = arith.constant 0 : i32
    return %c0_i32, %c0_i32_0 : i32, i32
  }
  func.func @transform_5(%arg0: i32) -> (i32, i32, i32) {
    %c0_i32 = arith.constant 0 : i32
    %c0_i32_0 = arith.constant 0 : i32
    %c0_i32_1 = arith.constant 0 : i32
    return %arg0, %c0_i32, %c0_i32_0 : i32, i32, i32
  }
  func.func @transform_6(%arg0: i32) -> (i32, i32) {
    %c0_i32 = arith.constant 0 : i32
    %c0_i32_0 = arith.constant 0 : i32
    %c0_i32_1 = arith.constant 0 : i32
    return %c0_i32, %c0_i32_0 : i32, i32
  }
}

</mosaic_0001>

<llo_original>
// kernel: tpu_custom_call.1
$region0: #{tpu_custom_call.1}
  #allocation0 [shape = 'u32[]', space=smem, size = 0x4, offset = 0x4, fixed_abs, tag = 'smem constant byte address 0x4 - core index']
  #allocation1 [shape = 'u32[144,128]{1,0:T(1,128)}', space=vmem, size = 0x12000, scoped, tag = 'internal scratch']
  %s0 = inlined_call_operand.hbm [shape: f32[8,8,256], index: 0, kind: input, shape index: {}]
  %s1 = inlined_call_operand.hbm [shape: f32[8,8,128], index: 1, kind: input, shape index: {}]
  %s2 = inlined_call_operand.hbm [shape: f32[8,256], index: 2, kind: input, shape index: {}]
  %s3 = inlined_call_operand.hbm [shape: f32[256,256], index: 3, kind: input, shape index: {}]
  %s4 = inlined_call_operand.hbm [shape: f32[256,128], index: 4, kind: input, shape index: {}]
  %s5 = inlined_call_operand.hbm [shape: f32[8,8,128], index: 5, kind: output, shape index: {0}]
  %s6 = inlined_call_operand.hbm [shape: f32[8,256], index: 6, kind: output, shape index: {1}]
  %7 = xla_tuple %s5, %s6
  %s8 = sld [smem:[#allocation0]]
  $region62: #{tpu_custom_call.1} parent=0
    _
  %s10 = ssub.s32 1, %s8
  %s11 = scalar_select 0, %s10, %s8
  $region1: #{tpu_custom_call.1} parent=0
    #allocation2 [shape = 'u8[65536]{0}', space=vmem, size = 0x10000, scoped, tag = 'input window, operand 0, single buffered']
    #allocation3 [shape = 's32[1]{0}', space=sflag, size = 0x4, scoped, tag = 'scoped memory for tpu_custom_call.1']
    #allocation4 [shape = 's32[1]{0}', space=sflag, size = 0x4, scoped, tag = 'scoped memory for tpu_custom_call.1']
    #allocation5 [shape = 'u8[32768]{0}', space=vmem, size = 0x8000, scoped, tag = 'input window, operand 1, single buffered']
    #allocation6 [shape = 's32[1]{0}', space=sflag, size = 0x4, scoped, tag = 'scoped memory for tpu_custom_call.1']
    #allocation7 [shape = 'u8[8192]{0}', space=vmem, size = 0x2000, scoped, tag = 'input window, operand 2, single buffered']
    #allocation8 [shape = 'u8[262144]{0}', space=vmem, size = 0x40000, scoped, tag = 'input window, operand 3, single buffered']
    #allocation9 [shape = 's32[1]{0}', space=sflag, size = 0x4, scoped, tag = 'scoped memory for tpu_custom_call.1']
    #allocation10 [shape = 'u8[131072]{0}', space=vmem, size = 0x20000, scoped, tag = 'input window, operand 4, single buffered']
    #allocation11 [shape = 'u8[32768]{0}', space=vmem, size = 0x8000, scoped, tag = 'output window, operand 0, single buffered']
    #allocation12 [shape = 'u8[8192]{0}', space=vmem, size = 0x2000, scoped, tag = 'output window, operand 1, single buffered']
    #allocation13 [shape = 's32[1]{0}', space=sflag, size = 0x4, scoped, tag = 'scoped memory for tpu_custom_call.1']
    %12 = vsyncpa [#allocation3], 0
    %13 = vsyncpa [#allocation6], 0
    %14 = vsyncpa [#allocation9], 0
    %15 = vsyncpa [#allocation4], 0
    %16 = vsyncpa [#allocation13], 0
    // Predicated region
    $region2: #{tpu_custom_call.1} parent=1 // pred_check
      _
    $region3: #{tpu_custom_call.1} parent=1 // pred_check_branch
      %18 = sbr.rel (0) target = $region5
    $region4: #{tpu_custom_call.1} parent=1 // pred_region
      %s20 = ssub.s32 2048, 2048
      %21 = vsyncadd [#allocation3], %s20
      %s22 = sshll.u32 [#allocation2], 4
      %s23 = int_to_ptr.vmem [resolvable:$true] %s22
      %28 = dma.hbm_to_vmem [thread:$0]  %s0, 2048, %s23, [#allocation3], 256, 256, 16
    $region5: #{tpu_custom_call.1} parent=1 // pred_fallthru
      _
    // Predicated region
    $region6: #{tpu_custom_call.1} parent=1 // pred_check
      _
    $region7: #{tpu_custom_call.1} parent=1 // pred_check_branch
      %30 = sbr.rel (0) target = $region9
    $region8: #{tpu_custom_call.1} parent=1 // pred_region
      %s32 = ssub.s32 1024, 1024
      %33 = vsyncadd [#allocation6], %s32
      %s34 = sshll.u32 [#allocation5], 4
      %s35 = int_to_ptr.vmem [resolvable:$true] %s34
      %40 = dma.hbm_to_vmem [thread:$0]  %s1, 1024, %s35, [#allocation6], 128, 128, 8
    $region9: #{tpu_custom_call.1} parent=1 // pred_fallthru
      _
    // Predicated region
    $region10: #{tpu_custom_call.1} parent=1 // pred_check
      _
    $region11: #{tpu_custom_call.1} parent=1 // pred_check_branch
      %42 = sbr.rel (0) target = $region13
    $region12: #{tpu_custom_call.1} parent=1 // pred_region
      %s44 = ssub.s32 256, 256
      %45 = vsyncadd [#allocation6], %s44
      %s47 = sshll.u32 [#allocation7], 4
      %s48 = int_to_ptr.vmem [resolvable:$true] %s47
      %50 = dma.hbm_to_vmem [thread:$0]  %s2, 256, %s48, [#allocation6]
    $region13: #{tpu_custom_call.1} parent=1 // pred_fallthru
      _
    // Predicated region
    $region14: #{tpu_custom_call.1} parent=1 // pred_check
      _
    $region15: #{tpu_custom_call.1} parent=1 // pred_check_branch
      %52 = sbr.rel (0) target = $region17
    $region16: #{tpu_custom_call.1} parent=1 // pred_region
      %s54 = ssub.s32 8192, 8192
      %55 = vsyncadd [#allocation9], %s54
      %s56 = sshll.u32 [#allocation8], 4
      %s57 = int_to_ptr.vmem [resolvable:$true] %s56
      %62 = dma.hbm_to_vmem [thread:$0]  %s3, 8192, %s57, [#allocation9], 256, 256, 16
    $region17: #{tpu_custom_call.1} parent=1 // pred_fallthru
      _
    // Predicated region
    $region18: #{tpu_custom_call.1} parent=1 // pred_check
      _
    $region19: #{tpu_custom_call.1} parent=1 // pred_check_branch
      %64 = sbr.rel (0) target = $region21
    $region20: #{tpu_custom_call.1} parent=1 // pred_region
      %s66 = ssub.s32 4096, 4096
      %67 = vsyncadd [#allocation9], %s66
      %s68 = sshll.u32 [#allocation10], 4
      %s69 = int_to_ptr.vmem [resolvable:$true] %s68
      %74 = dma.hbm_to_vmem [thread:$0]  %s4, 4096, %s69, [#allocation9], 128, 128, 8
    $region21: #{tpu_custom_call.1} parent=1 // pred_fallthru
      _
    // Predicated region
    $region22: #{tpu_custom_call.1} parent=1 // pred_check
      _
    $region23: #{tpu_custom_call.1} parent=1 // pred_check_branch
      %76 = sbr.rel (0) target = $region25
    $region24: #{tpu_custom_call.1} parent=1 // pred_region
      %77 = dma.done [#allocation3], 2048
    $region25: #{tpu_custom_call.1} parent=1 // pred_fallthru
      _
    // Predicated region
    $region26: #{tpu_custom_call.1} parent=1 // pred_check
      _
    $region27: #{tpu_custom_call.1} parent=1 // pred_check_branch
      %79 = sbr.rel (0) target = $region29
    $region28: #{tpu_custom_call.1} parent=1 // pred_region
      %80 = dma.done [#allocation6], 1024
    $region29: #{tpu_custom_call.1} parent=1 // pred_fallthru
      _
    // Predicated region
    $region30: #{tpu_custom_call.1} parent=1 // pred_check
      _
    $region31: #{tpu_custom_call.1} parent=1 // pred_check_branch
      %82 = sbr.rel (0) target = $region33
    $region32: #{tpu_custom_call.1} parent=1 // pred_region
      %83 = dma.done [#allocation6], 256
    $region33: #{tpu_custom_call.1} parent=1 // pred_fallthru
      _
    // Predicated region
    $region34: #{tpu_custom_call.1} parent=1 // pred_check
      _
    $region35: #{tpu_custom_call.1} parent=1 // pred_check_branch
      %85 = sbr.rel (0) target = $region37
    $region36: #{tpu_custom_call.1} parent=1 // pred_region
      %86 = dma.done [#allocation9], 8192
    $region37: #{tpu_custom_call.1} parent=1 // pred_fallthru
      _
    // Predicated region
    $region38: #{tpu_custom_call.1} parent=1 // pred_check
      _
    $region39: #{tpu_custom_call.1} parent=1 // pred_check_branch
      %88 = sbr.rel (0) target = $region41
    $region40: #{tpu_custom_call.1} parent=1 // pred_region
      %89 = dma.done [#allocation9], 4096
    $region41: #{tpu_custom_call.1} parent=1 // pred_fallthru
      _
    %p90 = scmp.eq.s32.totalorder 0, 0
    // Predicated region
    $region42: #{tpu_custom_call.1} parent=1 // pred_check
      %p91 = pneg %p90
    $region43: #{tpu_custom_call.1} parent=1 // pred_check_branch
      %93 = sbr.rel (%p91) target = $region45
    $region44: #{tpu_custom_call.1} parent=1 // pred_region
      %v94 = vld [vmem:[#allocation7] sm:$0xff]
      %v95 = vld [vmem:[#allocation7 + $0x8] sm:$0xff]
      %96 = vst [vmem:[#allocation12] sm:$0xff] %v94
      %97 = vst [vmem:[#allocation12 + $0x8] sm:$0xff] %v95
    $region45: #{tpu_custom_call.1} parent=1 // pred_fallthru
      _
    %v98 = vld [vmem:[#allocation8] sm:$0xff]
    %v99 = vld [vmem:[#allocation8 + $0x8] sm:$0xff]
    %v100 = vld [vmem:[#allocation8 + $0x10] sm:$0xff]
    %v101 = vld [vmem:[#allocation8 + $0x18] sm:$0xff]
    %v102 = vld [vmem:[#allocation8 + $0x20] sm:$0xff]
    %v103 = vld [vmem:[#allocation8 + $0x28] sm:$0xff]
    %v104 = vld [vmem:[#allocation8 + $0x30] sm:$0xff]
    %v105 = vld [vmem:[#allocation8 + $0x38] sm:$0xff]
    %v106 = vld [vmem:[#allocation8 + $0x40] sm:$0xff]
    %v107 = vld [vmem:[#allocation8 + $0x48] sm:$0xff]
    %v108 = vld [vmem:[#allocation8 + $0x50] sm:$0xff]
    %v109 = vld [vmem:[#allocation8 + $0x58] sm:$0xff]
    %v110 = vld [vmem:[#allocation8 + $0x60] sm:$0xff]
    %v111 = vld [vmem:[#allocation8 + $0x68] sm:$0xff]
    %v112 = vld [vmem:[#allocation8 + $0x70] sm:$0xff]
    %v113 = vld [vmem:[#allocation8 + $0x78] sm:$0xff]
    %v114 = vld [vmem:[#allocation8 + $0x80] sm:$0xff]
    %v115 = vld [vmem:[#allocation8 + $0x88] sm:$0xff]
    %v116 = vld [vmem:[#allocation8 + $0x90] sm:$0xff]
    %v117 = vld [vmem:[#allocation8 + $0x98] sm:$0xff]
    %v118 = vld [vmem:[#allocation8 + $0xa0] sm:$0xff]
    %v119 = vld [vmem:[#allocation8 + $0xa8] sm:$0xff]
    %v120 = vld [vmem:[#allocation8 + $0xb0] sm:$0xff]
    %v121 = vld [vmem:[#allocation8 + $0xb8] sm:$0xff]
    %v122 = vld [vmem:[#allocation8 + $0xc0] sm:$0xff]
    %v123 = vld [vmem:[#allocation8 + $0xc8] sm:$0xff]
    %v124 = vld [vmem:[#allocation8 + $0xd0] sm:$0xff]
    %v125 = vld [vmem:[#allocation8 + $0xd8] sm:$0xff]
    %v126 = vld [vmem:[#allocation8 + $0xe0] sm:$0xff]
    %v127 = vld [vmem:[#allocation8 + $0xe8] sm:$0xff]
    %v128 = vld [vmem:[#allocation8 + $0xf0] sm:$0xff]
    %v129 = vld [vmem:[#allocation8 + $0xf8] sm:$0xff]
    %v130 = vld [vmem:[#allocation8 + $0x100] sm:$0xff]
    %v131 = vld [vmem:[#allocation8 + $0x108] sm:$0xff]
    %v132 = vld [vmem:[#allocation8 + $0x110] sm:$0xff]
    %v133 = vld [vmem:[#allocation8 + $0x118] sm:$0xff]
    %v134 = vld [vmem:[#allocation8 + $0x120] sm:$0xff]
    %v135 = vld [vmem:[#allocation8 + $0x128] sm:$0xff]
    %v136 = vld [vmem:[#allocation8 + $0x130] sm:$0xff]
    %v137 = vld [vmem:[#allocation8 + $0x138] sm:$0xff]
    %v138 = vld [vmem:[#allocation8 + $0x140] sm:$0xff]
    %v139 = vld [vmem:[#allocation8 + $0x148] sm:$0xff]
    %v140 = vld [vmem:[#allocation8 + $0x150] sm:$0xff]
    %v141 = vld [vmem:[#allocation8 + $0x158] sm:$0xff]
    %v142 = vld [vmem:[#allocation8 + $0x160] sm:$0xff]
    %v143 = vld [vmem:[#allocation8 + $0x168] sm:$0xff]
    %v144 = vld [vmem:[#allocation8 + $0x170] sm:$0xff]
    %v145 = vld [vmem:[#allocation8 + $0x178] sm:$0xff]
    %v146 = vld [vmem:[#allocation8 + $0x180] sm:$0xff]
    %v147 = vld [vmem:[#allocation8 + $0x188] sm:$0xff]
    %v148 = vld [vmem:[#allocation8 + $0x190] sm:$0xff]
    %v149 = vld [vmem:[#allocation8 + $0x198] sm:$0xff]
    %v150 = vld [vmem:[#allocation8 + $0x1a0] sm:$0xff]
    %v151 = vld [vmem:[#allocation8 + $0x1a8] sm:$0xff]
    %v152 = vld [vmem:[#allocation8 + $0x1b0] sm:$0xff]
    %v153 = vld [vmem:[#allocation8 + $0x1b8] sm:$0xff]
    %v154 = vld [vmem:[#allocation8 + $0x1c0] sm:$0xff]
    %v155 = vld [vmem:[#allocation8 + $0x1c8] sm:$0xff]
    %v156 = vld [vmem:[#allocation8 + $0x1d0] sm:$0xff]
    %v157 = vld [vmem:[#allocation8 + $0x1d8] sm:$0xff]
    %v158 = vld [vmem:[#allocation8 + $0x1e0] sm:$0xff]
    %v159 = vld [vmem:[#allocation8 + $0x1e8] sm:$0xff]
    %v160 = vld [vmem:[#allocation8 + $0x1f0] sm:$0xff]
    %v161 = vld [vmem:[#allocation8 + $0x1f8] sm:$0xff]
    %v162 = vld [vmem:[#allocation10] sm:$0xff]
    %v163 = vld [vmem:[#allocation10 + $0x8] sm:$0xff]
    %v164 = vld [vmem:[#allocation10 + $0x10] sm:$0xff]
    %v165 = vld [vmem:[#allocation10 + $0x18] sm:$0xff]
    %v166 = vld [vmem:[#allocation10 + $0x20] sm:$0xff]
    %v167 = vld [vmem:[#allocation10 + $0x28] sm:$0xff]
    %v168 = vld [vmem:[#allocation10 + $0x30] sm:$0xff]
    %v169 = vld [vmem:[#allocation10 + $0x38] sm:$0xff]
    %v170 = vld [vmem:[#allocation10 + $0x40] sm:$0xff]
    %v171 = vld [vmem:[#allocation10 + $0x48] sm:$0xff]
    %v172 = vld [vmem:[#allocation10 + $0x50] sm:$0xff]
    %v173 = vld [vmem:[#allocation10 + $0x58] sm:$0xff]
    %v174 = vld [vmem:[#allocation10 + $0x60] sm:$0xff]
    %v175 = vld [vmem:[#allocation10 + $0x68] sm:$0xff]
    %v176 = vld [vmem:[#allocation10 + $0x70] sm:$0xff]
    %v177 = vld [vmem:[#allocation10 + $0x78] sm:$0xff]
    %v178 = vld [vmem:[#allocation10 + $0x80] sm:$0xff]
    %v179 = vld [vmem:[#allocation10 + $0x88] sm:$0xff]
    %v180 = vld [vmem:[#allocation10 + $0x90] sm:$0xff]
    %v181 = vld [vmem:[#allocation10 + $0x98] sm:$0xff]
    %v182 = vld [vmem:[#allocation10 + $0xa0] sm:$0xff]
    %v183 = vld [vmem:[#allocation10 + $0xa8] sm:$0xff]
    %v184 = vld [vmem:[#allocation10 + $0xb0] sm:$0xff]
    %v185 = vld [vmem:[#allocation10 + $0xb8] sm:$0xff]
    %v186 = vld [vmem:[#allocation10 + $0xc0] sm:$0xff]
    %v187 = vld [vmem:[#allocation10 + $0xc8] sm:$0xff]
    %v188 = vld [vmem:[#allocation10 + $0xd0] sm:$0xff]
    %v189 = vld [vmem:[#allocation10 + $0xd8] sm:$0xff]
    %v190 = vld [vmem:[#allocation10 + $0xe0] sm:$0xff]
    %v191 = vld [vmem:[#allocation10 + $0xe8] sm:$0xff]
    %v192 = vld [vmem:[#allocation10 + $0xf0] sm:$0xff]
    %v193 = vld [vmem:[#allocation10 + $0xf8] sm:$0xff]
    %v194 = vld [vmem:[#allocation12] sm:$0xff]
    %v195 = vld [vmem:[#allocation12 + $0x8] sm:$0xff]
    %v196 = vld [vmem:[#allocation2] sm:$0xff]
    %v197 = vld [vmem:[#allocation2 + $0x8] sm:$0xff]
    %198 = vmatprep.subr.mxu0 %v99
    %199 = vmatpush1.msra.mxu0 %v98
    %200 = vmatprep.subr.mxu0 %v101
    %201 = vmatpush1.msra.mxu0 %v100
    %202 = vmatprep.subr.mxu0 %v103
    %203 = vmatpush1.msra.mxu0 %v102
    %204 = vmatprep.subr.mxu0 %v105
    %205 = vmatpush1.msra.mxu0 %v104
    %206 = vmatprep.subr.mxu0 %v107
    %207 = vmatpush1.msra.mxu0 %v106
    %208 = vmatprep.subr.mxu0 %v109
    %209 = vmatpush1.msra.mxu0 %v108
    %210 = vmatprep.subr.mxu0 %v111
    %211 = vmatpush1.msra.mxu0 %v110
    %212 = vmatprep.subr.mxu0 %v113
    %213 = vmatpush1.msra.mxu0 %v112
    %214 = vmatprep.subr.mxu0 %v115
    %215 = vmatpush1.msra.mxu0 %v114
    %216 = vmatprep.subr.mxu0 %v117
    %217 = vmatpush1.msra.mxu0 %v116
    %218 = vmatprep.subr.mxu0 %v119
    %219 = vmatpush1.msra.mxu0 %v118
    %220 = vmatprep.subr.mxu0 %v121
    %221 = vmatpush1.msra.mxu0 %v120
    %222 = vmatprep.subr.mxu0 %v123
    %223 = vmatpush1.msra.mxu0 %v122
    %224 = vmatprep.subr.mxu0 %v125
    %225 = vmatpush1.msra.mxu0 %v124
    %226 = vmatprep.subr.mxu0 %v127
    %227 = vmatpush1.msra.mxu0 %v126
    %228 = vmatprep.subr.mxu0 %v129
    %229 = vmatpush1.msra.mxu0 %v128
    %230 = vmatprep.subr.mxu0 %v131
    %231 = vmatpush1.msra.mxu0 %v130
    %232 = vmatprep.subr.mxu0 %v133
    %233 = vmatpush1.msra.mxu0 %v132
    %234 = vmatprep.subr.mxu0 %v135
    %235 = vmatpush1.msra.mxu0 %v134
    %236 = vmatprep.subr.mxu0 %v137
    %237 = vmatpush1.msra.mxu0 %v136
    %238 = vmatprep.subr.mxu0 %v139
    %239 = vmatpush1.msra.mxu0 %v138
    %240 = vmatprep.subr.mxu0 %v141
    %241 = vmatpush1.msra.mxu0 %v140
    %242 = vmatprep.subr.mxu0 %v143
    %243 = vmatpush1.msra.mxu0 %v142
    %244 = vmatprep.subr.mxu0 %v145
    %245 = vmatpush1.msra.mxu0 %v144
    %246 = vmatprep.subr.mxu0 %v147
    %247 = vmatpush1.msra.mxu0 %v146
    %248 = vmatprep.subr.mxu0 %v149
    %249 = vmatpush1.msra.mxu0 %v148
    %250 = vmatprep.subr.mxu0 %v151
    %251 = vmatpush1.msra.mxu0 %v150
    %252 = vmatprep.subr.mxu0 %v153
    %253 = vmatpush1.msra.mxu0 %v152
    %254 = vmatprep.subr.mxu0 %v155
    %255 = vmatpush1.msra.mxu0 %v154
    %256 = vmatprep.subr.mxu0 %v157
    %257 = vmatpush1.msra.mxu0 %v156
    %258 = vmatprep.subr.mxu0 %v159
    %259 = vmatpush1.msra.mxu0 %v158
    %260 = vmatprep.subr.mxu0 %v161
    %261 = vmatpush1.msra.mxu0 %v160
    %262 = vmatprep.mubr.f32.mxu0 %v195
    %263 = vmatmul.mubr.f32.gmra.mrb[0].mxu0 %v194
    %v264 = vpop.f32.mrb[0].mxu0
    %v265 = vadd.f32 %v196, %v264
    %v266 = vpop.f32.mrb[0].mxu0
    %v267 = vadd.f32 %v197, %v266
    %268 = vdwg.mxu0
    %v269 = vld [vmem:[#allocation5] sm:$0xff]
    %270 = vmatprep.subr.mxu0 0.0
    %271 = vmatpush1.msra.mxu0 %v162
    %272 = vmatprep.subr.mxu0 0.0
    %273 = vmatpush1.msra.mxu0 %v163
    %274 = vmatprep.subr.mxu0 0.0
    %275 = vmatpush1.msra.mxu0 %v164
    %276 = vmatprep.subr.mxu0 0.0
    %277 = vmatpush1.msra.mxu0 %v165
    %278 = vmatprep.subr.mxu0 0.0
    %279 = vmatpush1.msra.mxu0 %v166
    %280 = vmatprep.subr.mxu0 0.0
    %281 = vmatpush1.msra.mxu0 %v167
    %282 = vmatprep.subr.mxu0 0.0
    %283 = vmatpush1.msra.mxu0 %v168
    %284 = vmatprep.subr.mxu0 0.0
    %285 = vmatpush1.msra.mxu0 %v169
    %286 = vmatprep.subr.mxu0 0.0
    %287 = vmatpush1.msra.mxu0 %v170
    %288 = vmatprep.subr.mxu0 0.0
    %289 = vmatpush1.msra.mxu0 %v171
    %290 = vmatprep.subr.mxu0 0.0
    %291 = vmatpush1.msra.mxu0 %v172
    %292 = vmatprep.subr.mxu0 0.0
    %293 = vmatpush1.msra.mxu0 %v173
    %294 = vmatprep.subr.mxu0 0.0
    %295 = vmatpush1.msra.mxu0 %v174
    %296 = vmatprep.subr.mxu0 0.0
    %297 = vmatpush1.msra.mxu0 %v175
    %298 = vmatprep.subr.mxu0 0.0
    %299 = vmatpush1.msra.mxu0 %v176
    %300 = vmatprep.subr.mxu0 0.0
    %301 = vmatpush1.msra.mxu0 %v177
    %302 = vmatprep.subr.mxu0 0.0
    %303 = vmatpush1.msra.mxu0 %v178
    %304 = vmatprep.subr.mxu0 0.0
    %305 = vmatpush1.msra.mxu0 %v179
    %306 = vmatprep.subr.mxu0 0.0
    %307 = vmatpush1.msra.mxu0 %v180
    %308 = vmatprep.subr.mxu0 0.0
    %309 = vmatpush1.msra.mxu0 %v181
    %310 = vmatprep.subr.mxu0 0.0
    %311 = vmatpush1.msra.mxu0 %v182
    %312 = vmatprep.subr.mxu0 0.0
    %313 = vmatpush1.msra.mxu0 %v183
    %314 = vmatprep.subr.mxu0 0.0
    %315 = vmatpush1.msra.mxu0 %v184
    %316 = vmatprep.subr.mxu0 0.0
    %317 = vmatpush1.msra.mxu0 %v185
    %318 = vmatprep.subr.mxu0 0.0
    %319 = vmatpush1.msra.mxu0 %v186
    %320 = vmatprep.subr.mxu0 0.0
    %321 = vmatpush1.msra.mxu0 %v187
    %322 = vmatprep.subr.mxu0 0.0
    %323 = vmatpush1.msra.mxu0 %v188
    %324 = vmatprep.subr.mxu0 0.0
    %325 = vmatpush1.msra.mxu0 %v189
    %326 = vmatprep.subr.mxu0 0.0
    %327 = vmatpush1.msra.mxu0 %v190
    %328 = vmatprep.subr.mxu0 0.0
    %329 = vmatpush1.msra.mxu0 %v191
    %330 = vmatprep.subr.mxu0 0.0
    %331 = vmatpush1.msra.mxu0 %v192
    %332 = vmatprep.subr.mxu0 0.0
    %333 = vmatpush1.msra.mxu0 %v193
    %334 = vmatprep.mubr.f32.mxu0 %v195
    %335 = vmatmul.mubr.f32.gmra.mrb[0].mxu0 %v194
    %v336 = vpop.f32.mrb[0].mxu0
    %v337 = vadd.f32 %v269, %v336
    %v338 = vpop.f32.mrb[0].mxu0
    %339 = vdwg.mxu0
    %v340 = vxor.u32 %v337, 2147483648
    %v341 = vmul.f32 %v340, 1.442695
    %v342 = vpow.pop %v341
    %v343 = vadd.f32 %v342, 1.0
    %v344 = vrcp.pop %v343
    %v345 = vmul.f32 1.0, %v344
    %346 = vst [vmem:[#allocation11] sm:$0xff] %v345
    %s347 = scalar_lea.vmem [#allocation2], 16
    %v348 = vld [vmem:[%s347] sm:$0xff]
    %v349 = vld [vmem:[%s347 + $0x8] sm:$0xff]
    %350 = vmatprep.subr.mxu0 %v99
    %351 = vmatpush1.msra.mxu0 %v98
    %352 = vmatprep.subr.mxu0 %v101
    %353 = vmatpush1.msra.mxu0 %v100
    %354 = vmatprep.subr.mxu0 %v103
    %355 = vmatpush1.msra.mxu0 %v102
    %356 = vmatprep.subr.mxu0 %v105
    %357 = vmatpush1.msra.mxu0 %v104
    %358 = vmatprep.subr.mxu0 %v107
    %359 = vmatpush1.msra.mxu0 %v106
    %360 = vmatprep.subr.mxu0 %v109
    %361 = vmatpush1.msra.mxu0 %v108
    %362 = vmatprep.subr.mxu0 %v111
    %363 = vmatpush1.msra.mxu0 %v110
    %364 = vmatprep.subr.mxu0 %v113
    %365 = vmatpush1.msra.mxu0 %v112
    %366 = vmatprep.subr.mxu0 %v115
    %367 = vmatpush1.msra.mxu0 %v114
    %368 = vmatprep.subr.mxu0 %v117
    %369 = vmatpush1.msra.mxu0 %v116
    %370 = vmatprep.subr.mxu0 %v119
    %371 = vmatpush1.msra.mxu0 %v118
    %372 = vmatprep.subr.mxu0 %v121
    %373 = vmatpush1.msra.mxu0 %v120
    %374 = vmatprep.subr.mxu0 %v123
    %375 = vmatpush1.msra.mxu0 %v122
    %376 = vmatprep.subr.mxu0 %v125
    %377 = vmatpush1.msra.mxu0 %v124
    %378 = vmatprep.subr.mxu0 %v127
    %379 = vmatpush1.msra.mxu0 %v126
    %380 = vmatprep.subr.mxu0 %v129
    %381 = vmatpush1.msra.mxu0 %v128
    %382 = vmatprep.subr.mxu0 %v131
    %383 = vmatpush1.msra.mxu0 %v130
    %384 = vmatprep.subr.mxu0 %v133
    %385 = vmatpush1.msra.mxu0 %v132
    %386 = vmatprep.subr.mxu0 %v135
    %387 = vmatpush1.msra.mxu0 %v134
    %388 = vmatprep.subr.mxu0 %v137
    %389 = vmatpush1.msra.mxu0 %v136
    %390 = vmatprep.subr.mxu0 %v139
    %391 = vmatpush1.msra.mxu0 %v138
    %392 = vmatprep.subr.mxu0 %v141
    %393 = vmatpush1.msra.mxu0 %v140
    %394 = vmatprep.subr.mxu0 %v143
    %395 = vmatpush1.msra.mxu0 %v142
    %396 = vmatprep.subr.mxu0 %v145
    %397 = vmatpush1.msra.mxu0 %v144
    %398 = vmatprep.subr.mxu0 %v147
    %399 = vmatpush1.msra.mxu0 %v146
    %400 = vmatprep.subr.mxu0 %v149
    %401 = vmatpush1.msra.mxu0 %v148
    %402 = vmatprep.subr.mxu0 %v151
    %403 = vmatpush1.msra.mxu0 %v150
    %404 = vmatprep.subr.mxu0 %v153
    %405 = vmatpush1.msra.mxu0 %v152
    %406 = vmatprep.subr.mxu0 %v155
    %407 = vmatpush1.msra.mxu0 %v154
    %408 = vmatprep.subr.mxu0 %v157
    %409 = vmatpush1.msra.mxu0 %v156
    %410 = vmatprep.subr.mxu0 %v159
    %411 = vmatpush1.msra.mxu0 %v158
    %412 = vmatprep.subr.mxu0 %v161
    %413 = vmatpush1.msra.mxu0 %v160
    %414 = vmatprep.mubr.f32.mxu0 %v267
    %415 = vmatmul.mubr.f32.gmra.mrb[0].mxu0 %v265
    %v416 = vpop.f32.mrb[0].mxu0
    %v417 = vadd.f32 %v348, %v416
    %v418 = vpop.f32.mrb[0].mxu0
    %v419 = vadd.f32 %v349, %v418
    %420 = vdwg.mxu0
    %s421 = scalar_lea.vmem [#allocation5], 8
    %v422 = vld [vmem:[%s421] sm:$0xff]
    %423 = vmatprep.subr.mxu0 0.0
    %424 = vmatpush1.msra.mxu0 %v162
    %425 = vmatprep.subr.mxu0 0.0
    %426 = vmatpush1.msra.mxu0 %v163
    %427 = vmatprep.subr.mxu0 0.0
    %428 = vmatpush1.msra.mxu0 %v164
    %429 = vmatprep.subr.mxu0 0.0
    %430 = vmatpush1.msra.mxu0 %v165
    %431 = vmatprep.subr.mxu0 0.0
    %432 = vmatpush1.msra.mxu0 %v166
    %433 = vmatprep.subr.mxu0 0.0
    %434 = vmatpush1.msra.mxu0 %v167
    %435 = vmatprep.subr.mxu0 0.0
    %436 = vmatpush1.msra.mxu0 %v168
    %437 = vmatprep.subr.mxu0 0.0
    %438 = vmatpush1.msra.mxu0 %v169
    %439 = vmatprep.subr.mxu0 0.0
    %440 = vmatpush1.msra.mxu0 %v170
    %441 = vmatprep.subr.mxu0 0.0
    %442 = vmatpush1.msra.mxu0 %v171
    %443 = vmatprep.subr.mxu0 0.0
    %444 = vmatpush1.msra.mxu0 %v172
    %445 = vmatprep.subr.mxu0 0.0
    %446 = vmatpush1.msra.mxu0 %v173
    %447 = vmatprep.subr.mxu0 0.0
    %448 = vmatpush1.msra.mxu0 %v174
    %449 = vmatprep.subr.mxu0 0.0
    %450 = vmatpush1.msra.mxu0 %v175
    %451 = vmatprep.subr.mxu0 0.0
    %452 = vmatpush1.msra.mxu0 %v176
    %453 = vmatprep.subr.mxu0 0.0
    %454 = vmatpush1.msra.mxu0 %v177
    %455 = vmatprep.subr.mxu0 0.0
    %456 = vmatpush1.msra.mxu0 %v178
    %457 = vmatprep.subr.mxu0 0.0
    %458 = vmatpush1.msra.mxu0 %v179
    %459 = vmatprep.subr.mxu0 0.0
    %460 = vmatpush1.msra.mxu0 %v180
    %461 = vmatprep.subr.mxu0 0.0
    %462 = vmatpush1.msra.mxu0 %v181
    %463 = vmatprep.subr.mxu0 0.0
    %464 = vmatpush1.msra.mxu0 %v182
    %465 = vmatprep.subr.mxu0 0.0
    %466 = vmatpush1.msra.mxu0 %v183
    %467 = vmatprep.subr.mxu0 0.0
    %468 = vmatpush1.msra.mxu0 %v184
    %469 = vmatprep.subr.mxu0 0.0
    %470 = vmatpush1.msra.mxu0 %v185
    %471 = vmatprep.subr.mxu0 0.0
    %472 = vmatpush1.msra.mxu0 %v186
    %473 = vmatprep.subr.mxu0 0.0
    %474 = vmatpush1.msra.mxu0 %v187
    %475 = vmatprep.subr.mxu0 0.0
    %476 = vmatpush1.msra.mxu0 %v188
    %477 = vmatprep.subr.mxu0 0.0
    %478 = vmatpush1.msra.mxu0 %v189
    %479 = vmatprep.subr.mxu0 0.0
    %480 = vmatpush1.msra.mxu0 %v190
    %481 = vmatprep.subr.mxu0 0.0
    %482 = vmatpush1.msra.mxu0 %v191
    %483 = vmatprep.subr.mxu0 0.0
    %484 = vmatpush1.msra.mxu0 %v192
    %485 = vmatprep.subr.mxu0 0.0
    %486 = vmatpush1.msra.mxu0 %v193
    %487 = vmatprep.mubr.f32.mxu0 %v267
    %488 = vmatmul.mubr.f32.gmra.mrb[0].mxu0 %v265
    %v489 = vpop.f32.mrb[0].mxu0
    %v490 = vadd.f32 %v422, %v489
    %v491 = vpop.f32.mrb[0].mxu0
    %492 = vdwg.mxu0
    %v493 = vxor.u32 %v490, 2147483648
    %v494 = vmul.f32 %v493, 1.442695
    %v495 = vpow.pop %v494
    %v496 = vadd.f32 %v495, 1.0
    %v497 = vrcp.pop %v496
    %v498 = vmul.f32 1.0, %v497
    %s499 = scalar_lea.vmem [#allocation11], 8
    %500 = vst [vmem:[%s499] sm:$0xff] %v498
    %s501 = scalar_lea.vmem [#allocation2], 32
    %v502 = vld [vmem:[%s501] sm:$0xff]
    %v503 = vld [vmem:[%s501 + $0x8] sm:$0xff]
    %504 = vmatprep.subr.mxu0 %v99
    %505 = vmatpush1.msra.mxu0 %v98
    %506 = vmatprep.subr.mxu0 %v101
    %507 = vmatpush1.msra.mxu0 %v100
    %508 = vmatprep.subr.mxu0 %v103
    %509 = vmatpush1.msra.mxu0 %v102
    %510 = vmatprep.subr.mxu0 %v105
    %511 = vmatpush1.msra.mxu0 %v104
    %512 = vmatprep.subr.mxu0 %v107
    %513 = vmatpush1.msra.mxu0 %v106
    %514 = vmatprep.subr.mxu0 %v109
    %515 = vmatpush1.msra.mxu0 %v108
    %516 = vmatprep.subr.mxu0 %v111
    %517 = vmatpush1.msra.mxu0 %v110
    %518 = vmatprep.subr.mxu0 %v113
    %519 = vmatpush1.msra.mxu0 %v112
    %520 = vmatprep.subr.mxu0 %v115
    %521 = vmatpush1.msra.mxu0 %v114
    %522 = vmatprep.subr.mxu0 %v117
    %523 = vmatpush1.msra.mxu0 %v116
    %524 = vmatprep.subr.mxu0 %v119
    %525 = vmatpush1.msra.mxu0 %v118
    %526 = vmatprep.subr.mxu0 %v121
    %527 = vmatpush1.msra.mxu0 %v120
    %528 = vmatprep.subr.mxu0 %v123
    %529 = vmatpush1.msra.mxu0 %v122
    %530 = vmatprep.subr.mxu0 %v125
    %531 = vmatpush1.msra.mxu0 %v124
    %532 = vmatprep.subr.mxu0 %v127
    %533 = vmatpush1.msra.mxu0 %v126
    %534 = vmatprep.subr.mxu0 %v129
    %535 = vmatpush1.msra.mxu0 %v128
    %536 = vmatprep.subr.mxu0 %v131
    %537 = vmatpush1.msra.mxu0 %v130
    %538 = vmatprep.subr.mxu0 %v133
    %539 = vmatpush1.msra.mxu0 %v132
    %540 = vmatprep.subr.mxu0 %v135
    %541 = vmatpush1.msra.mxu0 %v134
    %542 = vmatprep.subr.mxu0 %v137
    %543 = vmatpush1.msra.mxu0 %v136
    %544 = vmatprep.subr.mxu0 %v139
    %545 = vmatpush1.msra.mxu0 %v138
    %546 = vmatprep.subr.mxu0 %v141
    %547 = vmatpush1.msra.mxu0 %v140
    %548 = vmatprep.subr.mxu0 %v143
    %549 = vmatpush1.msra.mxu0 %v142
    %550 = vmatprep.subr.mxu0 %v145
    %551 = vmatpush1.msra.mxu0 %v144
    %552 = vmatprep.subr.mxu0 %v147
    %553 = vmatpush1.msra.mxu0 %v146
    %554 = vmatprep.subr.mxu0 %v149
    %555 = vmatpush1.msra.mxu0 %v148
    %556 = vmatprep.subr.mxu0 %v151
    %557 = vmatpush1.msra.mxu0 %v150
    %558 = vmatprep.subr.mxu0 %v153
    %559 = vmatpush1.msra.mxu0 %v152
    %560 = vmatprep.subr.mxu0 %v155
    %561 = vmatpush1.msra.mxu0 %v154
    %562 = vmatprep.subr.mxu0 %v157
    %563 = vmatpush1.msra.mxu0 %v156
    %564 = vmatprep.subr.mxu0 %v159
    %565 = vmatpush1.msra.mxu0 %v158
    %566 = vmatprep.subr.mxu0 %v161
    %567 = vmatpush1.msra.mxu0 %v160
    %568 = vmatprep.mubr.f32.mxu0 %v419
    %569 = vmatmul.mubr.f32.gmra.mrb[0].mxu0 %v417
    %v570 = vpop.f32.mrb[0].mxu0
    %v571 = vadd.f32 %v502, %v570
    %v572 = vpop.f32.mrb[0].mxu0
    %v573 = vadd.f32 %v503, %v572
    %574 = vdwg.mxu0
    %s575 = scalar_lea.vmem [#allocation5], 16
    %v576 = vld [vmem:[%s575] sm:$0xff]
    %577 = vmatprep.subr.mxu0 0.0
    %578 = vmatpush1.msra.mxu0 %v162
    %579 = vmatprep.subr.mxu0 0.0
    %580 = vmatpush1.msra.mxu0 %v163
    %581 = vmatprep.subr.mxu0 0.0
    %582 = vmatpush1.msra.mxu0 %v164
    %583 = vmatprep.subr.mxu0 0.0
    %584 = vmatpush1.msra.mxu0 %v165
    %585 = vmatprep.subr.mxu0 0.0
    %586 = vmatpush1.msra.mxu0 %v166
    %587 = vmatprep.subr.mxu0 0.0
    %588 = vmatpush1.msra.mxu0 %v167
    %589 = vmatprep.subr.mxu0 0.0
    %590 = vmatpush1.msra.mxu0 %v168
    %591 = vmatprep.subr.mxu0 0.0
    %592 = vmatpush1.msra.mxu0 %v169
    %593 = vmatprep.subr.mxu0 0.0
    %594 = vmatpush1.msra.mxu0 %v170
    %595 = vmatprep.subr.mxu0 0.0
    %596 = vmatpush1.msra.mxu0 %v171
    %597 = vmatprep.subr.mxu0 0.0
    %598 = vmatpush1.msra.mxu0 %v172
    %599 = vmatprep.subr.mxu0 0.0
    %600 = vmatpush1.msra.mxu0 %v173
    %601 = vmatprep.subr.mxu0 0.0
    %602 = vmatpush1.msra.mxu0 %v174
    %603 = vmatprep.subr.mxu0 0.0
    %604 = vmatpush1.msra.mxu0 %v175
    %605 = vmatprep.subr.mxu0 0.0
    %606 = vmatpush1.msra.mxu0 %v176
    %607 = vmatprep.subr.mxu0 0.0
    %608 = vmatpush1.msra.mxu0 %v177
    %609 = vmatprep.subr.mxu0 0.0
    %610 = vmatpush1.msra.mxu0 %v178
    %611 = vmatprep.subr.mxu0 0.0
    %612 = vmatpush1.msra.mxu0 %v179
    %613 = vmatprep.subr.mxu0 0.0
    %614 = vmatpush1.msra.mxu0 %v180
    %615 = vmatprep.subr.mxu0 0.0
    %616 = vmatpush1.msra.mxu0 %v181
    %617 = vmatprep.subr.mxu0 0.0
    %618 = vmatpush1.msra.mxu0 %v182
    %619 = vmatprep.subr.mxu0 0.0
    %620 = vmatpush1.msra.mxu0 %v183
    %621 = vmatprep.subr.mxu0 0.0
    %622 = vmatpush1.msra.mxu0 %v184
    %623 = vmatprep.subr.mxu0 0.0
    %624 = vmatpush1.msra.mxu0 %v185
    %625 = vmatprep.subr.mxu0 0.0
    %626 = vmatpush1.msra.mxu0 %v186
    %627 = vmatprep.subr.mxu0 0.0
    %628 = vmatpush1.msra.mxu0 %v187
    %629 = vmatprep.subr.mxu0 0.0
    %630 = vmatpush1.msra.mxu0 %v188
    %631 = vmatprep.subr.mxu0 0.0
    %632 = vmatpush1.msra.mxu0 %v189
    %633 = vmatprep.subr.mxu0 0.0
    %634 = vmatpush1.msra.mxu0 %v190
    %635 = vmatprep.subr.mxu0 0.0
    %636 = vmatpush1.msra.mxu0 %v191
    %637 = vmatprep.subr.mxu0 0.0
    %638 = vmatpush1.msra.mxu0 %v192
    %639 = vmatprep.subr.mxu0 0.0
    %640 = vmatpush1.msra.mxu0 %v193
    %641 = vmatprep.mubr.f32.mxu0 %v419
    %642 = vmatmul.mubr.f32.gmra.mrb[0].mxu0 %v417
    %v643 = vpop.f32.mrb[0].mxu0
    %v644 = vadd.f32 %v576, %v643
    %v645 = vpop.f32.mrb[0].mxu0
    %646 = vdwg.mxu0
    %v647 = vxor.u32 %v644, 2147483648
    %v648 = vmul.f32 %v647, 1.442695
    %v649 = vpow.pop %v648
    %v650 = vadd.f32 %v649, 1.0
    %v651 = vrcp.pop %v650
    %v652 = vmul.f32 1.0, %v651
    %s653 = scalar_lea.vmem [#allocation11], 16
    %654 = vst [vmem:[%s653] sm:$0xff] %v652
    %s655 = scalar_lea.vmem [#allocation2], 48
    %v656 = vld [vmem:[%s655] sm:$0xff]
    %v657 = vld [vmem:[%s655 + $0x8] sm:$0xff]
    %658 = vmatprep.subr.mxu0 %v99
    %659 = vmatpush1.msra.mxu0 %v98
    %660 = vmatprep.subr.mxu0 %v101
    %661 = vmatpush1.msra.mxu0 %v100
    %662 = vmatprep.subr.mxu0 %v103
    %663 = vmatpush1.msra.mxu0 %v102
    %664 = vmatprep.subr.mxu0 %v105
    %665 = vmatpush1.msra.mxu0 %v104
    %666 = vmatprep.subr.mxu0 %v107
    %667 = vmatpush1.msra.mxu0 %v106
    %668 = vmatprep.subr.mxu0 %v109
    %669 = vmatpush1.msra.mxu0 %v108
    %670 = vmatprep.subr.mxu0 %v111
    %671 = vmatpush1.msra.mxu0 %v110
    %672 = vmatprep.subr.mxu0 %v113
    %673 = vmatpush1.msra.mxu0 %v112
    %674 = vmatprep.subr.mxu0 %v115
    %675 = vmatpush1.msra.mxu0 %v114
    %676 = vmatprep.subr.mxu0 %v117
    %677 = vmatpush1.msra.mxu0 %v116
    %678 = vmatprep.subr.mxu0 %v119
    %679 = vmatpush1.msra.mxu0 %v118
    %680 = vmatprep.subr.mxu0 %v121
    %681 = vmatpush1.msra.mxu0 %v120
    %682 = vmatprep.subr.mxu0 %v123
    %683 = vmatpush1.msra.mxu0 %v122
    %684 = vmatprep.subr.mxu0 %v125
    %685 = vmatpush1.msra.mxu0 %v124
    %686 = vmatprep.subr.mxu0 %v127
    %687 = vmatpush1.msra.mxu0 %v126
    %688 = vmatprep.subr.mxu0 %v129
    %689 = vmatpush1.msra.mxu0 %v128
    %690 = vmatprep.subr.mxu0 %v131
    %691 = vmatpush1.msra.mxu0 %v130
    %692 = vmatprep.subr.mxu0 %v133
    %693 = vmatpush1.msra.mxu0 %v132
    %694 = vmatprep.subr.mxu0 %v135
    %695 = vmatpush1.msra.mxu0 %v134
    %696 = vmatprep.subr.mxu0 %v137
    %697 = vmatpush1.msra.mxu0 %v136
    %698 = vmatprep.subr.mxu0 %v139
    %699 = vmatpush1.msra.mxu0 %v138
    %700 = vmatprep.subr.mxu0 %v141
    %701 = vmatpush1.msra.mxu0 %v140
    %702 = vmatprep.subr.mxu0 %v143
    %703 = vmatpush1.msra.mxu0 %v142
    %704 = vmatprep.subr.mxu0 %v145
    %705 = vmatpush1.msra.mxu0 %v144
    %706 = vmatprep.subr.mxu0 %v147
    %707 = vmatpush1.msra.mxu0 %v146
    %708 = vmatprep.subr.mxu0 %v149
    %709 = vmatpush1.msra.mxu0 %v148
    %710 = vmatprep.subr.mxu0 %v151
    %711 = vmatpush1.msra.mxu0 %v150
    %712 = vmatprep.subr.mxu0 %v153
    %713 = vmatpush1.msra.mxu0 %v152
    %714 = vmatprep.subr.mxu0 %v155
    %715 = vmatpush1.msra.mxu0 %v154
    %716 = vmatprep.subr.mxu0 %v157
    %717 = vmatpush1.msra.mxu0 %v156
    %718 = vmatprep.subr.mxu0 %v159
    %719 = vmatpush1.msra.mxu0 %v158
    %720 = vmatprep.subr.mxu0 %v161
    %721 = vmatpush1.msra.mxu0 %v160
    %722 = vmatprep.mubr.f32.mxu0 %v573
    %723 = vmatmul.mubr.f32.gmra.mrb[0].mxu0 %v571
    %v724 = vpop.f32.mrb[0].mxu0
    %v725 = vadd.f32 %v656, %v724
    %v726 = vpop.f32.mrb[0].mxu0
    %v727 = vadd.f32 %v657, %v726
    %728 = vdwg.mxu0
    %s729 = scalar_lea.vmem [#allocation5], 24
    %v730 = vld [vmem:[%s729] sm:$0xff]
    %731 = vmatprep.subr.mxu0 0.0
    %732 = vmatpush1.msra.mxu0 %v162
    %733 = vmatprep.subr.mxu0 0.0
    %734 = vmatpush1.msra.mxu0 %v163
    %735 = vmatprep.subr.mxu0 0.0
    %736 = vmatpush1.msra.mxu0 %v164
    %737 = vmatprep.subr.mxu0 0.0
    %738 = vmatpush1.msra.mxu0 %v165
    %739 = vmatprep.subr.mxu0 0.0
    %740 = vmatpush1.msra.mxu0 %v166
    %741 = vmatprep.subr.mxu0 0.0
    %742 = vmatpush1.msra.mxu0 %v167
    %743 = vmatprep.subr.mxu0 0.0
    %744 = vmatpush1.msra.mxu0 %v168
    %745 = vmatprep.subr.mxu0 0.0
    %746 = vmatpush1.msra.mxu0 %v169
    %747 = vmatprep.subr.mxu0 0.0
    %748 = vmatpush1.msra.mxu0 %v170
    %749 = vmatprep.subr.mxu0 0.0
    %750 = vmatpush1.msra.mxu0 %v171
    %751 = vmatprep.subr.mxu0 0.0
    %752 = vmatpush1.msra.mxu0 %v172
    %753 = vmatprep.subr.mxu0 0.0
    %754 = vmatpush1.msra.mxu0 %v173
    %755 = vmatprep.subr.mxu0 0.0
    %756 = vmatpush1.msra.mxu0 %v174
    %757 = vmatprep.subr.mxu0 0.0
    %758 = vmatpush1.msra.mxu0 %v175
    %759 = vmatprep.subr.mxu0 0.0
    %760 = vmatpush1.msra.mxu0 %v176
    %761 = vmatprep.subr.mxu0 0.0
    %762 = vmatpush1.msra.mxu0 %v177
    %763 = vmatprep.subr.mxu0 0.0
    %764 = vmatpush1.msra.mxu0 %v178
    %765 = vmatprep.subr.mxu0 0.0
    %766 = vmatpush1.msra.mxu0 %v179
    %767 = vmatprep.subr.mxu0 0.0
    %768 = vmatpush1.msra.mxu0 %v180
    %769 = vmatprep.subr.mxu0 0.0
    %770 = vmatpush1.msra.mxu0 %v181
    %771 = vmatprep.subr.mxu0 0.0
    %772 = vmatpush1.msra.mxu0 %v182
    %773 = vmatprep.subr.mxu0 0.0
    %774 = vmatpush1.msra.mxu0 %v183
    %775 = vmatprep.subr.mxu0 0.0
    %776 = vmatpush1.msra.mxu0 %v184
    %777 = vmatprep.subr.mxu0 0.0
    %778 = vmatpush1.msra.mxu0 %v185
    %779 = vmatprep.subr.mxu0 0.0
    %780 = vmatpush1.msra.mxu0 %v186
    %781 = vmatprep.subr.mxu0 0.0
    %782 = vmatpush1.msra.mxu0 %v187
    %783 = vmatprep.subr.mxu0 0.0
    %784 = vmatpush1.msra.mxu0 %v188
    %785 = vmatprep.subr.mxu0 0.0
    %786 = vmatpush1.msra.mxu0 %v189
    %787 = vmatprep.subr.mxu0 0.0
    %788 = vmatpush1.msra.mxu0 %v190
    %789 = vmatprep.subr.mxu0 0.0
    %790 = vmatpush1.msra.mxu0 %v191
    %791 = vmatprep.subr.mxu0 0.0
    %792 = vmatpush1.msra.mxu0 %v192
    %793 = vmatprep.subr.mxu0 0.0
    %794 = vmatpush1.msra.mxu0 %v193
    %795 = vmatprep.mubr.f32.mxu0 %v573
    %796 = vmatmul.mubr.f32.gmra.mrb[0].mxu0 %v571
    %v797 = vpop.f32.mrb[0].mxu0
    %v798 = vadd.f32 %v730, %v797
    %v799 = vpop.f32.mrb[0].mxu0
    %800 = vdwg.mxu0
    %v801 = vxor.u32 %v798, 2147483648
    %v802 = vmul.f32 %v801, 1.442695
    %v803 = vpow.pop %v802
    %v804 = vadd.f32 %v803, 1.0
    %v805 = vrcp.pop %v804
    %v806 = vmul.f32 1.0, %v805
    %s807 = scalar_lea.vmem [#allocation11], 24
    %808 = vst [vmem:[%s807] sm:$0xff] %v806
    %s809 = scalar_lea.vmem [#allocation2], 64
    %v810 = vld [vmem:[%s809] sm:$0xff]
    %v811 = vld [vmem:[%s809 + $0x8] sm:$0xff]
    %812 = vmatprep.subr.mxu0 %v99
    %813 = vmatpush1.msra.mxu0 %v98
    %814 = vmatprep.subr.mxu0 %v101
    %815 = vmatpush1.msra.mxu0 %v100
    %816 = vmatprep.subr.mxu0 %v103
    %817 = vmatpush1.msra.mxu0 %v102
    %818 = vmatprep.subr.mxu0 %v105
    %819 = vmatpush1.msra.mxu0 %v104
    %820 = vmatprep.subr.mxu0 %v107
    %821 = vmatpush1.msra.mxu0 %v106
    %822 = vmatprep.subr.mxu0 %v109
    %823 = vmatpush1.msra.mxu0 %v108
    %824 = vmatprep.subr.mxu0 %v111
    %825 = vmatpush1.msra.mxu0 %v110
    %826 = vmatprep.subr.mxu0 %v113
    %827 = vmatpush1.msra.mxu0 %v112
    %828 = vmatprep.subr.mxu0 %v115
    %829 = vmatpush1.msra.mxu0 %v114
    %830 = vmatprep.subr.mxu0 %v117
    %831 = vmatpush1.msra.mxu0 %v116
    %832 = vmatprep.subr.mxu0 %v119
    %833 = vmatpush1.msra.mxu0 %v118
    %834 = vmatprep.subr.mxu0 %v121
    %835 = vmatpush1.msra.mxu0 %v120
    %836 = vmatprep.subr.mxu0 %v123
    %837 = vmatpush1.msra.mxu0 %v122
    %838 = vmatprep.subr.mxu0 %v125
    %839 = vmatpush1.msra.mxu0 %v124
    %840 = vmatprep.subr.mxu0 %v127
    %841 = vmatpush1.msra.mxu0 %v126
    %842 = vmatprep.subr.mxu0 %v129
    %843 = vmatpush1.msra.mxu0 %v128
    %844 = vmatprep.subr.mxu0 %v131
    %845 = vmatpush1.msra.mxu0 %v130
    %846 = vmatprep.subr.mxu0 %v133
    %847 = vmatpush1.msra.mxu0 %v132
    %848 = vmatprep.subr.mxu0 %v135
    %849 = vmatpush1.msra.mxu0 %v134
    %850 = vmatprep.subr.mxu0 %v137
    %851 = vmatpush1.msra.mxu0 %v136
    %852 = vmatprep.subr.mxu0 %v139
    %853 = vmatpush1.msra.mxu0 %v138
    %854 = vmatprep.subr.mxu0 %v141
    %855 = vmatpush1.msra.mxu0 %v140
    %856 = vmatprep.subr.mxu0 %v143
    %857 = vmatpush1.msra.mxu0 %v142
    %858 = vmatprep.subr.mxu0 %v145
    %859 = vmatpush1.msra.mxu0 %v144
    %860 = vmatprep.subr.mxu0 %v147
    %861 = vmatpush1.msra.mxu0 %v146
    %862 = vmatprep.subr.mxu0 %v149
    %863 = vmatpush1.msra.mxu0 %v148
    %864 = vmatprep.subr.mxu0 %v151
    %865 = vmatpush1.msra.mxu0 %v150
    %866 = vmatprep.subr.mxu0 %v153
    %867 = vmatpush1.msra.mxu0 %v152
    %868 = vmatprep.subr.mxu0 %v155
    %869 = vmatpush1.msra.mxu0 %v154
    %870 = vmatprep.subr.mxu0 %v157
    %871 = vmatpush1.msra.mxu0 %v156
    %872 = vmatprep.subr.mxu0 %v159
    %873 = vmatpush1.msra.mxu0 %v158
    %874 = vmatprep.subr.mxu0 %v161
    %875 = vmatpush1.msra.mxu0 %v160
    %876 = vmatprep.mubr.f32.mxu0 %v727
    %877 = vmatmul.mubr.f32.gmra.mrb[0].mxu0 %v725
    %v878 = vpop.f32.mrb[0].mxu0
    %v879 = vadd.f32 %v810, %v878
    %v880 = vpop.f32.mrb[0].mxu0
    %v881 = vadd.f32 %v811, %v880
    %882 = vdwg.mxu0
    %s883 = scalar_lea.vmem [#allocation5], 32
    %v884 = vld [vmem:[%s883] sm:$0xff]
    %885 = vmatprep.subr.mxu0 0.0
    %886 = vmatpush1.msra.mxu0 %v162
    %887 = vmatprep.subr.mxu0 0.0
    %888 = vmatpush1.msra.mxu0 %v163
    %889 = vmatprep.subr.mxu0 0.0
    %890 = vmatpush1.msra.mxu0 %v164
    %891 = vmatprep.subr.mxu0 0.0
    %892 = vmatpush1.msra.mxu0 %v165
    %893 = vmatprep.subr.mxu0 0.0
    %894 = vmatpush1.msra.mxu0 %v166
    %895 = vmatprep.subr.mxu0 0.0
    %896 = vmatpush1.msra.mxu0 %v167
    %897 = vmatprep.subr.mxu0 0.0
    %898 = vmatpush1.msra.mxu0 %v168
    %899 = vmatprep.subr.mxu0 0.0
    %900 = vmatpush1.msra.mxu0 %v169
    %901 = vmatprep.subr.mxu0 0.0
    %902 = vmatpush1.msra.mxu0 %v170
    %903 = vmatprep.subr.mxu0 0.0
    %904 = vmatpush1.msra.mxu0 %v171
    %905 = vmatprep.subr.mxu0 0.0
    %906 = vmatpush1.msra.mxu0 %v172
    %907 = vmatprep.subr.mxu0 0.0
    %908 = vmatpush1.msra.mxu0 %v173
    %909 = vmatprep.subr.mxu0 0.0
    %910 = vmatpush1.msra.mxu0 %v174
    %911 = vmatprep.subr.mxu0 0.0
    %912 = vmatpush1.msra.mxu0 %v175
    %913 = vmatprep.subr.mxu0 0.0
    %914 = vmatpush1.msra.mxu0 %v176
    %915 = vmatprep.subr.mxu0 0.0
    %916 = vmatpush1.msra.mxu0 %v177
    %917 = vmatprep.subr.mxu0 0.0
    %918 = vmatpush1.msra.mxu0 %v178
    %919 = vmatprep.subr.mxu0 0.0
    %920 = vmatpush1.msra.mxu0 %v179
    %921 = vmatprep.subr.mxu0 0.0
    %922 = vmatpush1.msra.mxu0 %v180
    %923 = vmatprep.subr.mxu0 0.0
    %924 = vmatpush1.msra.mxu0 %v181
    %925 = vmatprep.subr.mxu0 0.0
    %926 = vmatpush1.msra.mxu0 %v182
    %927 = vmatprep.subr.mxu0 0.0
    %928 = vmatpush1.msra.mxu0 %v183
    %929 = vmatprep.subr.mxu0 0.0
    %930 = vmatpush1.msra.mxu0 %v184
    %931 = vmatprep.subr.mxu0 0.0
    %932 = vmatpush1.msra.mxu0 %v185
    %933 = vmatprep.subr.mxu0 0.0
    %934 = vmatpush1.msra.mxu0 %v186
    %935 = vmatprep.subr.mxu0 0.0
    %936 = vmatpush1.msra.mxu0 %v187
    %937 = vmatprep.subr.mxu0 0.0
    %938 = vmatpush1.msra.mxu0 %v188
    %939 = vmatprep.subr.mxu0 0.0
    %940 = vmatpush1.msra.mxu0 %v189
    %941 = vmatprep.subr.mxu0 0.0
    %942 = vmatpush1.msra.mxu0 %v190
    %943 = vmatprep.subr.mxu0 0.0
    %944 = vmatpush1.msra.mxu0 %v191
    %945 = vmatprep.subr.mxu0 0.0
    %946 = vmatpush1.msra.mxu0 %v192
    %947 = vmatprep.subr.mxu0 0.0
    %948 = vmatpush1.msra.mxu0 %v193
    %949 = vmatprep.mubr.f32.mxu0 %v727
    %950 = vmatmul.mubr.f32.gmra.mrb[0].mxu0 %v725
    %v951 = vpop.f32.mrb[0].mxu0
    %v952 = vadd.f32 %v884, %v951
    %v953 = vpop.f32.mrb[0].mxu0
    %954 = vdwg.mxu0
    %v955 = vxor.u32 %v952, 2147483648
    %v956 = vmul.f32 %v955, 1.442695
    %v957 = vpow.pop %v956
    %v958 = vadd.f32 %v957, 1.0
    %v959 = vrcp.pop %v958
    %v960 = vmul.f32 1.0, %v959
    %s961 = scalar_lea.vmem [#allocation11], 32
    %962 = vst [vmem:[%s961] sm:$0xff] %v960
    %s963 = scalar_lea.vmem [#allocation2], 80
    %v964 = vld [vmem:[%s963] sm:$0xff]
    %v965 = vld [vmem:[%s963 + $0x8] sm:$0xff]
    %966 = vmatprep.subr.mxu0 %v99
    %967 = vmatpush1.msra.mxu0 %v98
    %968 = vmatprep.subr.mxu0 %v101
    %969 = vmatpush1.msra.mxu0 %v100
    %970 = vmatprep.subr.mxu0 %v103
    %971 = vmatpush1.msra.mxu0 %v102
    %972 = vmatprep.subr.mxu0 %v105
    %973 = vmatpush1.msra.mxu0 %v104
    %974 = vmatprep.subr.mxu0 %v107
    %975 = vmatpush1.msra.mxu0 %v106
    %976 = vmatprep.subr.mxu0 %v109
    %977 = vmatpush1.msra.mxu0 %v108
    %978 = vmatprep.subr.mxu0 %v111
    %979 = vmatpush1.msra.mxu0 %v110
    %980 = vmatprep.subr.mxu0 %v113
    %981 = vmatpush1.msra.mxu0 %v112
    %982 = vmatprep.subr.mxu0 %v115
    %983 = vmatpush1.msra.mxu0 %v114
    %984 = vmatprep.subr.mxu0 %v117
    %985 = vmatpush1.msra.mxu0 %v116
    %986 = vmatprep.subr.mxu0 %v119
    %987 = vmatpush1.msra.mxu0 %v118
    %988 = vmatprep.subr.mxu0 %v121
    %989 = vmatpush1.msra.mxu0 %v120
    %990 = vmatprep.subr.mxu0 %v123
    %991 = vmatpush1.msra.mxu0 %v122
    %992 = vmatprep.subr.mxu0 %v125
    %993 = vmatpush1.msra.mxu0 %v124
    %994 = vmatprep.subr.mxu0 %v127
    %995 = vmatpush1.msra.mxu0 %v126
    %996 = vmatprep.subr.mxu0 %v129
    %997 = vmatpush1.msra.mxu0 %v128
    %998 = vmatprep.subr.mxu0 %v131
    %999 = vmatpush1.msra.mxu0 %v130
    %1000 = vmatprep.subr.mxu0 %v133
    %1001 = vmatpush1.msra.mxu0 %v132
    %1002 = vmatprep.subr.mxu0 %v135
    %1003 = vmatpush1.msra.mxu0 %v134
    %1004 = vmatprep.subr.mxu0 %v137
    %1005 = vmatpush1.msra.mxu0 %v136
    %1006 = vmatprep.subr.mxu0 %v139
    %1007 = vmatpush1.msra.mxu0 %v138
    %1008 = vmatprep.subr.mxu0 %v141
    %1009 = vmatpush1.msra.mxu0 %v140
    %1010 = vmatprep.subr.mxu0 %v143
    %1011 = vmatpush1.msra.mxu0 %v142
    %1012 = vmatprep.subr.mxu0 %v145
    %1013 = vmatpush1.msra.mxu0 %v144
    %1014 = vmatprep.subr.mxu0 %v147
    %1015 = vmatpush1.msra.mxu0 %v146
    %1016 = vmatprep.subr.mxu0 %v149
    %1017 = vmatpush1.msra.mxu0 %v148
    %1018 = vmatprep.subr.mxu0 %v151
    %1019 = vmatpush1.msra.mxu0 %v150
    %1020 = vmatprep.subr.mxu0 %v153
    %1021 = vmatpush1.msra.mxu0 %v152
    %1022 = vmatprep.subr.mxu0 %v155
    %1023 = vmatpush1.msra.mxu0 %v154
    %1024 = vmatprep.subr.mxu0 %v157
    %1025 = vmatpush1.msra.mxu0 %v156
    %1026 = vmatprep.subr.mxu0 %v159
    %1027 = vmatpush1.msra.mxu0 %v158
    %1028 = vmatprep.subr.mxu0 %v161
    %1029 = vmatpush1.msra.mxu0 %v160
    %1030 = vmatprep.mubr.f32.mxu0 %v881
    %1031 = vmatmul.mubr.f32.gmra.mrb[0].mxu0 %v879
    %v1032 = vpop.f32.mrb[0].mxu0
    %v1033 = vadd.f32 %v964, %v1032
    %v1034 = vpop.f32.mrb[0].mxu0
    %v1035 = vadd.f32 %v965, %v1034
    %1036 = vdwg.mxu0
    %s1037 = scalar_lea.vmem [#allocation5], 40
    %v1038 = vld [vmem:[%s1037] sm:$0xff]
    %1039 = vmatprep.subr.mxu0 0.0
    %1040 = vmatpush1.msra.mxu0 %v162
    %1041 = vmatprep.subr.mxu0 0.0
    %1042 = vmatpush1.msra.mxu0 %v163
    %1043 = vmatprep.subr.mxu0 0.0
    %1044 = vmatpush1.msra.mxu0 %v164
    %1045 = vmatprep.subr.mxu0 0.0
    %1046 = vmatpush1.msra.mxu0 %v165
    %1047 = vmatprep.subr.mxu0 0.0
    %1048 = vmatpush1.msra.mxu0 %v166
    %1049 = vmatprep.subr.mxu0 0.0
    %1050 = vmatpush1.msra.mxu0 %v167
    %1051 = vmatprep.subr.mxu0 0.0
    %1052 = vmatpush1.msra.mxu0 %v168
    %1053 = vmatprep.subr.mxu0 0.0
    %1054 = vmatpush1.msra.mxu0 %v169
    %1055 = vmatprep.subr.mxu0 0.0
    %1056 = vmatpush1.msra.mxu0 %v170
    %1057 = vmatprep.subr.mxu0 0.0
    %1058 = vmatpush1.msra.mxu0 %v171
    %1059 = vmatprep.subr.mxu0 0.0
    %1060 = vmatpush1.msra.mxu0 %v172
    %1061 = vmatprep.subr.mxu0 0.0
    %1062 = vmatpush1.msra.mxu0 %v173
    %1063 = vmatprep.subr.mxu0 0.0
    %1064 = vmatpush1.msra.mxu0 %v174
    %1065 = vmatprep.subr.mxu0 0.0
    %1066 = vmatpush1.msra.mxu0 %v175
    %1067 = vmatprep.subr.mxu0 0.0
    %1068 = vmatpush1.msra.mxu0 %v176
    %1069 = vmatprep.subr.mxu0 0.0
    %1070 = vmatpush1.msra.mxu0 %v177
    %1071 = vmatprep.subr.mxu0 0.0
    %1072 = vmatpush1.msra.mxu0 %v178
    %1073 = vmatprep.subr.mxu0 0.0
    %1074 = vmatpush1.msra.mxu0 %v179
    %1075 = vmatprep.subr.mxu0 0.0
    %1076 = vmatpush1.msra.mxu0 %v180
    %1077 = vmatprep.subr.mxu0 0.0
    %1078 = vmatpush1.msra.mxu0 %v181
    %1079 = vmatprep.subr.mxu0 0.0
    %1080 = vmatpush1.msra.mxu0 %v182
    %1081 = vmatprep.subr.mxu0 0.0
    %1082 = vmatpush1.msra.mxu0 %v183
    %1083 = vmatprep.subr.mxu0 0.0
    %1084 = vmatpush1.msra.mxu0 %v184
    %1085 = vmatprep.subr.mxu0 0.0
    %1086 = vmatpush1.msra.mxu0 %v185
    %1087 = vmatprep.subr.mxu0 0.0
    %1088 = vmatpush1.msra.mxu0 %v186
    %1089 = vmatprep.subr.mxu0 0.0
    %1090 = vmatpush1.msra.mxu0 %v187
    %1091 = vmatprep.subr.mxu0 0.0
    %1092 = vmatpush1.msra.mxu0 %v188
    %1093 = vmatprep.subr.mxu0 0.0
    %1094 = vmatpush1.msra.mxu0 %v189
    %1095 = vmatprep.subr.mxu0 0.0
    %1096 = vmatpush1.msra.mxu0 %v190
    %1097 = vmatprep.subr.mxu0 0.0
    %1098 = vmatpush1.msra.mxu0 %v191
    %1099 = vmatprep.subr.mxu0 0.0
    %1100 = vmatpush1.msra.mxu0 %v192
    %1101 = vmatprep.subr.mxu0 0.0
    %1102 = vmatpush1.msra.mxu0 %v193
    %1103 = vmatprep.mubr.f32.mxu0 %v881
    %1104 = vmatmul.mubr.f32.gmra.mrb[0].mxu0 %v879
    %v1105 = vpop.f32.mrb[0].mxu0
    %v1106 = vadd.f32 %v1038, %v1105
    %v1107 = vpop.f32.mrb[0].mxu0
    %1108 = vdwg.mxu0
    %v1109 = vxor.u32 %v1106, 2147483648
    %v1110 = vmul.f32 %v1109, 1.442695
    %v1111 = vpow.pop %v1110
    %v1112 = vadd.f32 %v1111, 1.0
    %v1113 = vrcp.pop %v1112
    %v1114 = vmul.f32 1.0, %v1113
    %s1115 = scalar_lea.vmem [#allocation11], 40
    %1116 = vst [vmem:[%s1115] sm:$0xff] %v1114
    %s1117 = scalar_lea.vmem [#allocation2], 96
    %v1118 = vld [vmem:[%s1117] sm:$0xff]
    %v1119 = vld [vmem:[%s1117 + $0x8] sm:$0xff]
    %1120 = vmatprep.subr.mxu0 %v99
    %1121 = vmatpush1.msra.mxu0 %v98
    %1122 = vmatprep.subr.mxu0 %v101
    %1123 = vmatpush1.msra.mxu0 %v100
    %1124 = vmatprep.subr.mxu0 %v103
    %1125 = vmatpush1.msra.mxu0 %v102
    %1126 = vmatprep.subr.mxu0 %v105
    %1127 = vmatpush1.msra.mxu0 %v104
    %1128 = vmatprep.subr.mxu0 %v107
    %1129 = vmatpush1.msra.mxu0 %v106
    %1130 = vmatprep.subr.mxu0 %v109
    %1131 = vmatpush1.msra.mxu0 %v108
    %1132 = vmatprep.subr.mxu0 %v111
    %1133 = vmatpush1.msra.mxu0 %v110
    %1134 = vmatprep.subr.mxu0 %v113
    %1135 = vmatpush1.msra.mxu0 %v112
    %1136 = vmatprep.subr.mxu0 %v115
    %1137 = vmatpush1.msra.mxu0 %v114
    %1138 = vmatprep.subr.mxu0 %v117
    %1139 = vmatpush1.msra.mxu0 %v116
    %1140 = vmatprep.subr.mxu0 %v119
    %1141 = vmatpush1.msra.mxu0 %v118
    %1142 = vmatprep.subr.mxu0 %v121
    %1143 = vmatpush1.msra.mxu0 %v120
    %1144 = vmatprep.subr.mxu0 %v123
    %1145 = vmatpush1.msra.mxu0 %v122
    %1146 = vmatprep.subr.mxu0 %v125
    %1147 = vmatpush1.msra.mxu0 %v124
    %1148 = vmatprep.subr.mxu0 %v127
    %1149 = vmatpush1.msra.mxu0 %v126
    %1150 = vmatprep.subr.mxu0 %v129
    %1151 = vmatpush1.msra.mxu0 %v128
    %1152 = vmatprep.subr.mxu0 %v131
    %1153 = vmatpush1.msra.mxu0 %v130
    %1154 = vmatprep.subr.mxu0 %v133
    %1155 = vmatpush1.msra.mxu0 %v132
    %1156 = vmatprep.subr.mxu0 %v135
    %1157 = vmatpush1.msra.mxu0 %v134
    %1158 = vmatprep.subr.mxu0 %v137
    %1159 = vmatpush1.msra.mxu0 %v136
    %1160 = vmatprep.subr.mxu0 %v139
    %1161 = vmatpush1.msra.mxu0 %v138
    %1162 = vmatprep.subr.mxu0 %v141
    %1163 = vmatpush1.msra.mxu0 %v140
    %1164 = vmatprep.subr.mxu0 %v143
    %1165 = vmatpush1.msra.mxu0 %v142
    %1166 = vmatprep.subr.mxu0 %v145
    %1167 = vmatpush1.msra.mxu0 %v144
    %1168 = vmatprep.subr.mxu0 %v147
    %1169 = vmatpush1.msra.mxu0 %v146
    %1170 = vmatprep.subr.mxu0 %v149
    %1171 = vmatpush1.msra.mxu0 %v148
    %1172 = vmatprep.subr.mxu0 %v151
    %1173 = vmatpush1.msra.mxu0 %v150
    %1174 = vmatprep.subr.mxu0 %v153
    %1175 = vmatpush1.msra.mxu0 %v152
    %1176 = vmatprep.subr.mxu0 %v155
    %1177 = vmatpush1.msra.mxu0 %v154
    %1178 = vmatprep.subr.mxu0 %v157
    %1179 = vmatpush1.msra.mxu0 %v156
    %1180 = vmatprep.subr.mxu0 %v159
    %1181 = vmatpush1.msra.mxu0 %v158
    %1182 = vmatprep.subr.mxu0 %v161
    %1183 = vmatpush1.msra.mxu0 %v160
    %1184 = vmatprep.mubr.f32.mxu0 %v1035
    %1185 = vmatmul.mubr.f32.gmra.mrb[0].mxu0 %v1033
    %v1186 = vpop.f32.mrb[0].mxu0
    %v1187 = vadd.f32 %v1118, %v1186
    %v1188 = vpop.f32.mrb[0].mxu0
    %v1189 = vadd.f32 %v1119, %v1188
    %1190 = vdwg.mxu0
    %s1191 = scalar_lea.vmem [#allocation5], 48
    %v1192 = vld [vmem:[%s1191] sm:$0xff]
    %1193 = vmatprep.subr.mxu0 0.0
    %1194 = vmatpush1.msra.mxu0 %v162
    %1195 = vmatprep.subr.mxu0 0.0
    %1196 = vmatpush1.msra.mxu0 %v163
    %1197 = vmatprep.subr.mxu0 0.0
    %1198 = vmatpush1.msra.mxu0 %v164
    %1199 = vmatprep.subr.mxu0 0.0
    %1200 = vmatpush1.msra.mxu0 %v165
    %1201 = vmatprep.subr.mxu0 0.0
    %1202 = vmatpush1.msra.mxu0 %v166
    %1203 = vmatprep.subr.mxu0 0.0
    %1204 = vmatpush1.msra.mxu0 %v167
    %1205 = vmatprep.subr.mxu0 0.0
    %1206 = vmatpush1.msra.mxu0 %v168
    %1207 = vmatprep.subr.mxu0 0.0
    %1208 = vmatpush1.msra.mxu0 %v169
    %1209 = vmatprep.subr.mxu0 0.0
    %1210 = vmatpush1.msra.mxu0 %v170
    %1211 = vmatprep.subr.mxu0 0.0
    %1212 = vmatpush1.msra.mxu0 %v171
    %1213 = vmatprep.subr.mxu0 0.0
    %1214 = vmatpush1.msra.mxu0 %v172
    %1215 = vmatprep.subr.mxu0 0.0
    %1216 = vmatpush1.msra.mxu0 %v173
    %1217 = vmatprep.subr.mxu0 0.0
    %1218 = vmatpush1.msra.mxu0 %v174
    %1219 = vmatprep.subr.mxu0 0.0
    %1220 = vmatpush1.msra.mxu0 %v175
    %1221 = vmatprep.subr.mxu0 0.0
    %1222 = vmatpush1.msra.mxu0 %v176
    %1223 = vmatprep.subr.mxu0 0.0
    %1224 = vmatpush1.msra.mxu0 %v177
    %1225 = vmatprep.subr.mxu0 0.0
    %1226 = vmatpush1.msra.mxu0 %v178
    %1227 = vmatprep.subr.mxu0 0.0
    %1228 = vmatpush1.msra.mxu0 %v179
    %1229 = vmatprep.subr.mxu0 0.0
    %1230 = vmatpush1.msra.mxu0 %v180
    %1231 = vmatprep.subr.mxu0 0.0
    %1232 = vmatpush1.msra.mxu0 %v181
    %1233 = vmatprep.subr.mxu0 0.0
    %1234 = vmatpush1.msra.mxu0 %v182
    %1235 = vmatprep.subr.mxu0 0.0
    %1236 = vmatpush1.msra.mxu0 %v183
    %1237 = vmatprep.subr.mxu0 0.0
    %1238 = vmatpush1.msra.mxu0 %v184
    %1239 = vmatprep.subr.mxu0 0.0
    %1240 = vmatpush1.msra.mxu0 %v185
    %1241 = vmatprep.subr.mxu0 0.0
    %1242 = vmatpush1.msra.mxu0 %v186
    %1243 = vmatprep.subr.mxu0 0.0
    %1244 = vmatpush1.msra.mxu0 %v187
    %1245 = vmatprep.subr.mxu0 0.0
    %1246 = vmatpush1.msra.mxu0 %v188
    %1247 = vmatprep.subr.mxu0 0.0
    %1248 = vmatpush1.msra.mxu0 %v189
    %1249 = vmatprep.subr.mxu0 0.0
    %1250 = vmatpush1.msra.mxu0 %v190
    %1251 = vmatprep.subr.mxu0 0.0
    %1252 = vmatpush1.msra.mxu0 %v191
    %1253 = vmatprep.subr.mxu0 0.0
    %1254 = vmatpush1.msra.mxu0 %v192
    %1255 = vmatprep.subr.mxu0 0.0
    %1256 = vmatpush1.msra.mxu0 %v193
    %1257 = vmatprep.mubr.f32.mxu0 %v1035
    %1258 = vmatmul.mubr.f32.gmra.mrb[0].mxu0 %v1033
    %v1259 = vpop.f32.mrb[0].mxu0
    %v1260 = vadd.f32 %v1192, %v1259
    %v1261 = vpop.f32.mrb[0].mxu0
    %1262 = vdwg.mxu0
    %v1263 = vxor.u32 %v1260, 2147483648
    %v1264 = vmul.f32 %v1263, 1.442695
    %v1265 = vpow.pop %v1264
    %v1266 = vadd.f32 %v1265, 1.0
    %v1267 = vrcp.pop %v1266
    %v1268 = vmul.f32 1.0, %v1267
    %s1269 = scalar_lea.vmem [#allocation11], 48
    %1270 = vst [vmem:[%s1269] sm:$0xff] %v1268
    %s1271 = scalar_lea.vmem [#allocation2], 112
    %v1272 = vld [vmem:[%s1271] sm:$0xff]
    %v1273 = vld [vmem:[%s1271 + $0x8] sm:$0xff]
    %1274 = vmatprep.subr.mxu0 %v99
    %1275 = vmatpush1.msra.mxu0 %v98
    %1276 = vmatprep.subr.mxu0 %v101
    %1277 = vmatpush1.msra.mxu0 %v100
    %1278 = vmatprep.subr.mxu0 %v103
    %1279 = vmatpush1.msra.mxu0 %v102
    %1280 = vmatprep.subr.mxu0 %v105
    %1281 = vmatpush1.msra.mxu0 %v104
    %1282 = vmatprep.subr.mxu0 %v107
    %1283 = vmatpush1.msra.mxu0 %v106
    %1284 = vmatprep.subr.mxu0 %v109
    %1285 = vmatpush1.msra.mxu0 %v108
    %1286 = vmatprep.subr.mxu0 %v111
    %1287 = vmatpush1.msra.mxu0 %v110
    %1288 = vmatprep.subr.mxu0 %v113
    %1289 = vmatpush1.msra.mxu0 %v112
    %1290 = vmatprep.subr.mxu0 %v115
    %1291 = vmatpush1.msra.mxu0 %v114
    %1292 = vmatprep.subr.mxu0 %v117
    %1293 = vmatpush1.msra.mxu0 %v116
    %1294 = vmatprep.subr.mxu0 %v119
    %1295 = vmatpush1.msra.mxu0 %v118
    %1296 = vmatprep.subr.mxu0 %v121
    %1297 = vmatpush1.msra.mxu0 %v120
    %1298 = vmatprep.subr.mxu0 %v123
    %1299 = vmatpush1.msra.mxu0 %v122
    %1300 = vmatprep.subr.mxu0 %v125
    %1301 = vmatpush1.msra.mxu0 %v124
    %1302 = vmatprep.subr.mxu0 %v127
    %1303 = vmatpush1.msra.mxu0 %v126
    %1304 = vmatprep.subr.mxu0 %v129
    %1305 = vmatpush1.msra.mxu0 %v128
    %1306 = vmatprep.subr.mxu0 %v131
    %1307 = vmatpush1.msra.mxu0 %v130
    %1308 = vmatprep.subr.mxu0 %v133
    %1309 = vmatpush1.msra.mxu0 %v132
    %1310 = vmatprep.subr.mxu0 %v135
    %1311 = vmatpush1.msra.mxu0 %v134
    %1312 = vmatprep.subr.mxu0 %v137
    %1313 = vmatpush1.msra.mxu0 %v136
    %1314 = vmatprep.subr.mxu0 %v139
    %1315 = vmatpush1.msra.mxu0 %v138
    %1316 = vmatprep.subr.mxu0 %v141
    %1317 = vmatpush1.msra.mxu0 %v140
    %1318 = vmatprep.subr.mxu0 %v143
    %1319 = vmatpush1.msra.mxu0 %v142
    %1320 = vmatprep.subr.mxu0 %v145
    %1321 = vmatpush1.msra.mxu0 %v144
    %1322 = vmatprep.subr.mxu0 %v147
    %1323 = vmatpush1.msra.mxu0 %v146
    %1324 = vmatprep.subr.mxu0 %v149
    %1325 = vmatpush1.msra.mxu0 %v148
    %1326 = vmatprep.subr.mxu0 %v151
    %1327 = vmatpush1.msra.mxu0 %v150
    %1328 = vmatprep.subr.mxu0 %v153
    %1329 = vmatpush1.msra.mxu0 %v152
    %1330 = vmatprep.subr.mxu0 %v155
    %1331 = vmatpush1.msra.mxu0 %v154
    %1332 = vmatprep.subr.mxu0 %v157
    %1333 = vmatpush1.msra.mxu0 %v156
    %1334 = vmatprep.subr.mxu0 %v159
    %1335 = vmatpush1.msra.mxu0 %v158
    %1336 = vmatprep.subr.mxu0 %v161
    %1337 = vmatpush1.msra.mxu0 %v160
    %1338 = vmatprep.mubr.f32.mxu0 %v1189
    %1339 = vmatmul.mubr.f32.gmra.mrb[0].mxu0 %v1187
    %v1340 = vpop.f32.mrb[0].mxu0
    %v1341 = vadd.f32 %v1272, %v1340
    %v1342 = vpop.f32.mrb[0].mxu0
    %v1343 = vadd.f32 %v1273, %v1342
    %1344 = vdwg.mxu0
    %s1345 = scalar_lea.vmem [#allocation5], 56
    %v1346 = vld [vmem:[%s1345] sm:$0xff]
    %1347 = vmatprep.subr.mxu0 0.0
    %1348 = vmatpush1.msra.mxu0 %v162
    %1349 = vmatprep.subr.mxu0 0.0
    %1350 = vmatpush1.msra.mxu0 %v163
    %1351 = vmatprep.subr.mxu0 0.0
    %1352 = vmatpush1.msra.mxu0 %v164
    %1353 = vmatprep.subr.mxu0 0.0
    %1354 = vmatpush1.msra.mxu0 %v165
    %1355 = vmatprep.subr.mxu0 0.0
    %1356 = vmatpush1.msra.mxu0 %v166
    %1357 = vmatprep.subr.mxu0 0.0
    %1358 = vmatpush1.msra.mxu0 %v167
    %1359 = vmatprep.subr.mxu0 0.0
    %1360 = vmatpush1.msra.mxu0 %v168
    %1361 = vmatprep.subr.mxu0 0.0
    %1362 = vmatpush1.msra.mxu0 %v169
    %1363 = vmatprep.subr.mxu0 0.0
    %1364 = vmatpush1.msra.mxu0 %v170
    %1365 = vmatprep.subr.mxu0 0.0
    %1366 = vmatpush1.msra.mxu0 %v171
    %1367 = vmatprep.subr.mxu0 0.0
    %1368 = vmatpush1.msra.mxu0 %v172
    %1369 = vmatprep.subr.mxu0 0.0
    %1370 = vmatpush1.msra.mxu0 %v173
    %1371 = vmatprep.subr.mxu0 0.0
    %1372 = vmatpush1.msra.mxu0 %v174
    %1373 = vmatprep.subr.mxu0 0.0
    %1374 = vmatpush1.msra.mxu0 %v175
    %1375 = vmatprep.subr.mxu0 0.0
    %1376 = vmatpush1.msra.mxu0 %v176
    %1377 = vmatprep.subr.mxu0 0.0
    %1378 = vmatpush1.msra.mxu0 %v177
    %1379 = vmatprep.subr.mxu0 0.0
    %1380 = vmatpush1.msra.mxu0 %v178
    %1381 = vmatprep.subr.mxu0 0.0
    %1382 = vmatpush1.msra.mxu0 %v179
    %1383 = vmatprep.subr.mxu0 0.0
    %1384 = vmatpush1.msra.mxu0 %v180
    %1385 = vmatprep.subr.mxu0 0.0
    %1386 = vmatpush1.msra.mxu0 %v181
    %1387 = vmatprep.subr.mxu0 0.0
    %1388 = vmatpush1.msra.mxu0 %v182
    %1389 = vmatprep.subr.mxu0 0.0
    %1390 = vmatpush1.msra.mxu0 %v183
    %1391 = vmatprep.subr.mxu0 0.0
    %1392 = vmatpush1.msra.mxu0 %v184
    %1393 = vmatprep.subr.mxu0 0.0
    %1394 = vmatpush1.msra.mxu0 %v185
    %1395 = vmatprep.subr.mxu0 0.0
    %1396 = vmatpush1.msra.mxu0 %v186
    %1397 = vmatprep.subr.mxu0 0.0
    %1398 = vmatpush1.msra.mxu0 %v187
    %1399 = vmatprep.subr.mxu0 0.0
    %1400 = vmatpush1.msra.mxu0 %v188
    %1401 = vmatprep.subr.mxu0 0.0
    %1402 = vmatpush1.msra.mxu0 %v189
    %1403 = vmatprep.subr.mxu0 0.0
    %1404 = vmatpush1.msra.mxu0 %v190
    %1405 = vmatprep.subr.mxu0 0.0
    %1406 = vmatpush1.msra.mxu0 %v191
    %1407 = vmatprep.subr.mxu0 0.0
    %1408 = vmatpush1.msra.mxu0 %v192
    %1409 = vmatprep.subr.mxu0 0.0
    %1410 = vmatpush1.msra.mxu0 %v193
    %1411 = vmatprep.mubr.f32.mxu0 %v1189
    %1412 = vmatmul.mubr.f32.gmra.mrb[0].mxu0 %v1187
    %v1413 = vpop.f32.mrb[0].mxu0
    %v1414 = vadd.f32 %v1346, %v1413
    %v1415 = vpop.f32.mrb[0].mxu0
    %1416 = vdwg.mxu0
    %v1417 = vxor.u32 %v1414, 2147483648
    %v1418 = vmul.f32 %v1417, 1.442695
    %v1419 = vpow.pop %v1418
    %v1420 = vadd.f32 %v1419, 1.0
    %v1421 = vrcp.pop %v1420
    %v1422 = vmul.f32 1.0, %v1421
    %s1423 = scalar_lea.vmem [#allocation11], 56
    %1424 = vst [vmem:[%s1423] sm:$0xff] %v1422
    %1425 = vst [vmem:[#allocation12] sm:$0xff] %v1341
    %1426 = vst [vmem:[#allocation12 + $0x8] sm:$0xff] %v1343
    // Predicated region
    $region46: #{tpu_custom_call.1} parent=1 // pred_check
      _
    $region47: #{tpu_custom_call.1} parent=1 // pred_check_branch
      %1428 = sbr.rel (0) target = $region49
    $region48: #{tpu_custom_call.1} parent=1 // pred_region
      %s1430 = ssub.s32 1024, 1024
      %1431 = vsyncadd [#allocation4], %s1430
      %s1432 = sshll.u32 [#allocation11], 4
      %s1433 = int_to_ptr.vmem [resolvable:$true] %s1432
      %1438 = dma.vmem_to_hbm [thread:$0]  %s1433, 1024, %s5, [#allocation4], 128, 128, 8
    $region49: #{tpu_custom_call.1} parent=1 // pred_fallthru
      _
    // Predicated region
    $region50: #{tpu_custom_call.1} parent=1 // pred_check
      _
    $region51: #{tpu_custom_call.1} parent=1 // pred_check_branch
      %1440 = sbr.rel (0) target = $region53
    $region52: #{tpu_custom_call.1} parent=1 // pred_region
      %s1442 = ssub.s32 256, 256
      %1443 = vsyncadd [#allocation13], %s1442
      %s1445 = sshll.u32 [#allocation12], 4
      %s1446 = int_to_ptr.vmem [resolvable:$true] %s1445
      %1448 = dma.vmem_to_hbm [thread:$0]  %s1446, 256, %s6, [#allocation13]
    $region53: #{tpu_custom_call.1} parent=1 // pred_fallthru
      _
    // Predicated region
    $region54: #{tpu_custom_call.1} parent=1 // pred_check
      _
    $region55: #{tpu_custom_call.1} parent=1 // pred_check_branch
      %1450 = sbr.rel (0) target = $region57
    $region56: #{tpu_custom_call.1} parent=1 // pred_region
      %1451 = dma.done [#allocation4], 1024
    $region57: #{tpu_custom_call.1} parent=1 // pred_fallthru
      _
    // Predicated region
    $region58: #{tpu_custom_call.1} parent=1 // pred_check
      _
    $region59: #{tpu_custom_call.1} parent=1 // pred_check_branch
      %1453 = sbr.rel (0) target = $region61
    $region60: #{tpu_custom_call.1} parent=1 // pred_region
      %1454 = dma.done [#allocation13], 256
    $region61: #{tpu_custom_call.1} parent=1 // pred_fallthru
      _
    %1455 = vsyncpa [#allocation3], 1
    %1456 = vsyncpa [#allocation6], 1
    %1457 = vsyncpa [#allocation9], 1
    %1458 = vsyncpa [#allocation4], 1
    %1459 = vsyncpa [#allocation13], 1

</llo_original>
